<compile_context>
chip_gen: v7x
topology: tpu7x:2x2x1
jax: 0.10.0
libtpu: 0.0.40
codegen_flags: <defaults>
</compile_context>

<pallas_src>
import jax
import jax.numpy as jnp
import numpy as np
from jax.experimental import pallas as pl
from jax.experimental.pallas import tpu as pltpu


# -----------------------------------------------------------------------------
# Kernels
# -----------------------------------------------------------------------------
def _noisy_linear_train_kernel(x_ref, w_mu_ref, w_sigma_ref, eps_in_ref,
                               eps_out_ref, b_mu_ref, b_sigma_ref, out_ref):
    """One (batch tile, out-feature tile) of the training-mode forward.

    y = x @ W_mu + ((x * eps_in) @ W_sigma) * eps_out + (b_mu + b_sigma * eps_out)

    The factorized noise is never expanded into an (in, out) matrix: it enters
    as a lane-dense row scale on x (VPU) and a row scale on the sigma matmul
    result (VPU); the only weight-sized work is the two MXU passes.
    """
    f32 = jnp.float32
    x = x_ref[...]                                       # (bm, in)
    eps_out = eps_out_ref[...]                           # (1, bn) f32
    y_mu = jnp.dot(x, w_mu_ref[...], preferred_element_type=f32)
    y_sg = jnp.dot(x * eps_in_ref[...], w_sigma_ref[...],
                   preferred_element_type=f32)
    bias = b_mu_ref[...] + b_sigma_ref[...] * eps_out    # (1, bn)
    out_ref[...] = y_mu + y_sg * eps_out + bias


def _linear_eval_kernel(x_ref, w_mu_ref, b_mu_ref, out_ref):
    """Eval-mode forward: y = x @ W_mu + b_mu (no sigma/eps operands at all)."""
    out_ref[...] = (jnp.dot(x_ref[...], w_mu_ref[...],
                            preferred_element_type=jnp.float32)
                    + b_mu_ref[...])


# -----------------------------------------------------------------------------
# Tile-size heuristics
# -----------------------------------------------------------------------------
def _round_up(x, m):
    return (x + m - 1) // m * m


def _choose_block_m(B, in_f, out_f, *, max_block_m=512,
                    pipeline_vmem_budget=12 << 20):
    """Batch tile size.

    * as large as possible (amortize ~0.35us/step overhead, fill MXU rows)
    * but keep >= 2 batch tiles so v7x's two TensorCores both get work
    * and keep the double-buffered x / y tiles inside a conservative VMEM budget.
    """
    if B <= 8:
        return 8
    bytes_per_row = 2 * (in_f + out_f) * 4          # x + y tile, double-buffered, f32
    cap = max(8, (pipeline_vmem_budget // bytes_per_row) // 8 * 8)
    cap = min(cap, max_block_m)
    target = _round_up(-(-B // 2), 8)               # ~B/2 -> at least two tiles
    return int(max(8, min(cap, target)))


def _choose_block_n(out_f, in_f, n_weight_mats, *, weight_vmem_budget=8 << 20,
                    itemsize=4):
    """Out-feature tile size for the weight matrices.

    The full (in_f, out_f) weights stay VMEM-resident when they fit the budget;
    otherwise out_f is tiled in multiples of 128 so the resident weight
    footprint stays bounded (v7x only has 64 MiB of VMEM).
    """
    full_bytes = n_weight_mats * in_f * out_f * itemsize
    if full_bytes <= weight_vmem_budget or out_f % 128 != 0:
        return out_f
    per_col = n_weight_mats * in_f * itemsize * 2   # x2: tiled blocks double-buffer
    max_cols = max(128, (weight_vmem_budget // per_col) // 128 * 128)
    block_n = 128
    for cand in range(min(out_f, max_cols), 127, -128):
        if out_f % cand == 0:
            block_n = cand
            break
    return block_n


# -----------------------------------------------------------------------------
# Wrapper
# -----------------------------------------------------------------------------
def noisy_linear_forward(params, x, *, training=True, block_m=None, block_n=None,
                         weight_dtype=jnp.float32):
    """x: (B, in_features) -> (B, out_features), float32 output.

    weight_dtype=jnp.bfloat16 halves the weight HBM stream (recommended on
    v6e); accumulation is always f32.
    """
    B, in_f = x.shape
    out_f = params["w_mu"].shape[1]

    if block_m is None:
        block_m = _choose_block_m(B, in_f, out_f)
    block_m = max(8, _round_up(int(block_m), 8))

    n_w = 2 if training else 1
    if block_n is None:
        block_n = _choose_block_n(out_f, in_f, n_w)
    assert out_f % block_n == 0, "block_n must divide out_features"
    assert block_n == out_f or block_n % 128 == 0, "tiled block_n must be 128-aligned"

    # Pad the batch up to a whole number of tiles; padded rows are sliced away.
    B_pad = _round_up(B, block_m)
    x = x.astype(weight_dtype)
    if B_pad != B:
        x = jnp.pad(x, ((0, B_pad - B), (0, 0)))

    w_mu = params["w_mu"].astype(weight_dtype)                           # (in, out)
    b_mu = params["b_mu"].reshape(1, out_f).astype(jnp.float32)
    if training:
        w_sigma = params["w_sigma"].astype(weight_dtype)                 # (in, out)
        eps_in = params["eps_in"].reshape(1, in_f).astype(weight_dtype)  # lane-dense row
        eps_out = params["eps_out"].reshape(1, out_f).astype(jnp.float32)
        b_sigma = params["b_sigma"].reshape(1, out_f).astype(jnp.float32)

    n_out = out_f // block_n
    n_bm = B_pad // block_m
    # Weight / bias blocks are fully grid-invariant only when out_f is untiled.
    weights_invariant = (n_out == 1)

    def run(request_single_buffer):
        def spec(shape, index_map, invariant=False):
            if request_single_buffer and invariant:
                # Grid-invariant block: one resident buffer is enough — halves
                # the weight VMEM footprint vs. the default double buffer.
                return pl.BlockSpec(shape, index_map, pipeline_mode=pl.Buffered(1))
            return pl.BlockSpec(shape, index_map)

        x_spec = spec((block_m, in_f), lambda j, i: (i, 0))
        w_spec = lambda: spec((in_f, block_n), lambda j, i: (0, j),
                              invariant=weights_invariant)
        row_spec = lambda: spec((1, block_n), lambda j, i: (0, j),
                                invariant=weights_invariant)
        out_spec = pl.BlockSpec((block_m, block_n), lambda j, i: (i, j))

        if training:
            kernel = _noisy_linear_train_kernel
            in_specs = [x_spec, w_spec(), w_spec(),
                        spec((1, in_f), lambda j, i: (0, 0), invariant=True),
                        row_spec(), row_spec(), row_spec()]
            args = (x, w_mu, w_sigma, eps_in, eps_out, b_mu, b_sigma)
        else:
            kernel = _linear_eval_kernel
            in_specs = [x_spec, w_spec(), row_spec()]
            args = (x, w_mu, b_mu)

        return pl.pallas_call(
            kernel,
            out_shape=jax.ShapeDtypeStruct((B_pad, out_f), jnp.float32),
            # out tiles outer so each weight tile stays resident across every
            # batch tile (weights are streamed from HBM exactly once).
            grid=(n_out, n_bm),
            in_specs=in_specs,
            out_specs=out_spec,
            compiler_params=pltpu.CompilerParams(
                dimension_semantics=("parallel", "parallel")),
        )(*args)

    try:
        out = run(True)
    except Exception:
        # Fallback for jax builds without BlockSpec.pipeline_mode / Buffered(1)
        # support; identical semantics, just default double buffering.
        out = run(False)

    return out[:B] if B_pad != B else out


# -----------------------------------------------------------------------------
# Parameter / noise init (mirrors the torch module; weights stored transposed)
# -----------------------------------------------------------------------------
def _scale_noise(key, n):
    z = jax.random.normal(key, (n,), jnp.float32)
    return jnp.sign(z) * jnp.sqrt(jnp.abs(z))


def reset_noise(params, key):
    """Equivalent of NoisyLinear.reset_noise(): new factorized eps vectors."""
    k_in, k_out = jax.random.split(key)
    in_f, out_f = params["w_mu"].shape
    new = dict(params)
    new["eps_in"] = _scale_noise(k_in, in_f)
    new["eps_out"] = _scale_noise(k_out, out_f)
    return new


def init_noisy_linear(key, in_features, out_features, sigma_init=0.5):
    k_w, k_b, k_noise = jax.random.split(key, 3)
    mu_range = 1.0 / np.sqrt(in_features)
    params = {
        # stored (in, out) == torch weight.T, so the kernel does x @ W
        "w_mu": jax.random.uniform(k_w, (in_features, out_features),
                                   jnp.float32, -mu_range, mu_range),
        "w_sigma": jnp.full((in_features, out_features),
                            sigma_init / np.sqrt(in_features), jnp.float32),
        "b_mu": jax.random.uniform(k_b, (out_features,),
                                   jnp.float32, -mu_range, mu_range),
        "b_sigma": jnp.full((out_features,),
                            sigma_init / np.sqrt(out_features), jnp.float32),
        "eps_in": jnp.zeros((in_features,), jnp.float32),
        "eps_out": jnp.zeros((out_features,), jnp.float32),
    }
    return reset_noise(params, k_noise)


# -----------------------------------------------------------------------------
# Pure-JAX reference (mirrors the torch forward exactly)
# -----------------------------------------------------------------------------
def noisy_linear_reference(params, x, *, training=True):
    if training:
        w_eps = params["eps_in"][:, None] * params["eps_out"][None, :]
        w = params["w_mu"] + params["w_sigma"] * w_eps
        b = params["b_mu"] + params["b_sigma"] * params["eps_out"]
    else:
        w = params["w_mu"]
        b = params["b_mu"]
    return x @ w + b


if __name__ == "__main__":
    key = jax.random.PRNGKey(0)
    # Case 1: NoisyNet DQN head (512 -> 128), 2 batch tiles, resident weights.
    # Case 2: ragged batch (13) -> padded tail tile.
    # Case 3: forced out_f tiling path (block_n=128 over out_f=256).
    cases = [
        dict(B=16, in_f=512, out_f=128, kwargs={}),
        dict(B=13, in_f=256, out_f=128, kwargs={}),
        dict(B=16, in_f=512, out_f=256, kwargs=dict(block_n=128)),
    ]
    for c in cases:
        key, kp, kx = jax.random.split(key, 3)
        params = init_noisy_linear(kp, c["in_f"], c["out_f"])
        x = jax.random.normal(kx, (c["B"], c["in_f"]), jnp.float32)
        for training in (True, False):
            out = noisy_linear_forward(params, x, training=training, **c["kwargs"])
            out = jax.block_until_ready(out)
            ref = noisy_linear_reference(params, x, training=training)
            np.testing.assert_allclose(np.asarray(out), np.asarray(ref),
                                       rtol=1e-3, atol=1e-3)

    print("KERNEL_OK")
</pallas_src>

<mosaic_0001>
module attributes {stable_mosaic.version = 11 : i64} {
  func.func @_noisy_linear_train_kernel(%arg0: i32, %arg1: i32, %arg2: memref<8x512xf32, #tpu.memory_space<vmem>>, %arg3: memref<512x128xf32, #tpu.memory_space<vmem>>, %arg4: memref<512x128xf32, #tpu.memory_space<vmem>>, %arg5: memref<1x512xf32, #tpu.memory_space<vmem>>, %arg6: memref<1x128xf32, #tpu.memory_space<vmem>>, %arg7: memref<1x128xf32, #tpu.memory_space<vmem>>, %arg8: memref<1x128xf32, #tpu.memory_space<vmem>>, %arg9: memref<8x128xf32, #tpu.memory_space<vmem>>) attributes {dimension_semantics = [#tpu.dimension_semantics<parallel>, #tpu.dimension_semantics<parallel>], iteration_bounds = array<i64: 1, 2>, scalar_prefetch = 0 : i64, scratch_operands = 0 : i64, tpu.core_type = #tpu.core_type<tc>, window_params = [{transform_indices = @transform_0, window_bounds = array<i64: 8, 512>}, {pipeline_mode = #tpu.pipeline_mode<synchronous>, transform_indices = @transform_1, window_bounds = array<i64: 512, 128>}, {pipeline_mode = #tpu.pipeline_mode<synchronous>, transform_indices = @transform_2, window_bounds = array<i64: 512, 128>}, {pipeline_mode = #tpu.pipeline_mode<synchronous>, transform_indices = @transform_3, window_bounds = array<i64: 1, 512>}, {pipeline_mode = #tpu.pipeline_mode<synchronous>, transform_indices = @transform_4, window_bounds = array<i64: 1, 128>}, {pipeline_mode = #tpu.pipeline_mode<synchronous>, transform_indices = @transform_5, window_bounds = array<i64: 1, 128>}, {pipeline_mode = #tpu.pipeline_mode<synchronous>, transform_indices = @transform_6, window_bounds = array<i64: 1, 128>}, {transform_indices = @transform_7, window_bounds = array<i64: 8, 128>}]} {
    %c0 = arith.constant 0 : index
    %c0_0 = arith.constant 0 : index
    %0 = vector.load %arg2[%c0, %c0_0] : memref<8x512xf32, #tpu.memory_space<vmem>>, vector<8x512xf32>
    %c0_1 = arith.constant 0 : index
    %c0_2 = arith.constant 0 : index
    %1 = vector.load %arg6[%c0_1, %c0_2] : memref<1x128xf32, #tpu.memory_space<vmem>>, vector<1x128xf32>
    %c0_3 = arith.constant 0 : index
    %c0_4 = arith.constant 0 : index
    %2 = vector.load %arg3[%c0_3, %c0_4] : memref<512x128xf32, #tpu.memory_space<vmem>>, vector<512x128xf32>
    %cst = arith.constant dense<0.000000e+00> : vector<8x128xf32>
    %3 = tpu.matmul %0, %2, %cst {dimension_numbers = #tpu.dot_dimension_numbers<[1], [0], [0], [1], [0, 0, 1, 1], [], []>} : vector<8x512xf32>, vector<512x128xf32>, vector<8x128xf32> -> vector<8x128xf32>
    %c0_5 = arith.constant 0 : index
    %c0_6 = arith.constant 0 : index
    %4 = vector.load %arg5[%c0_5, %c0_6] : memref<1x512xf32, #tpu.memory_space<vmem>>, vector<1x512xf32>
    %5 = vector.broadcast %4 : vector<1x512xf32> to vector<8x512xf32>
    %6 = arith.mulf %0, %5 : vector<8x512xf32>
    %c0_7 = arith.constant 0 : index
    %c0_8 = arith.constant 0 : index
    %7 = vector.load %arg4[%c0_7, %c0_8] : memref<512x128xf32, #tpu.memory_space<vmem>>, vector<512x128xf32>
    %cst_9 = arith.constant dense<0.000000e+00> : vector<8x128xf32>
    %8 = tpu.matmul %6, %7, %cst_9 {dimension_numbers = #tpu.dot_dimension_numbers<[1], [0], [0], [1], [0, 0, 1, 1], [], []>} : vector<8x512xf32>, vector<512x128xf32>, vector<8x128xf32> -> vector<8x128xf32>
    %c0_10 = arith.constant 0 : index
    %c0_11 = arith.constant 0 : index
    %9 = vector.load %arg7[%c0_10, %c0_11] : memref<1x128xf32, #tpu.memory_space<vmem>>, vector<1x128xf32>
    %c0_12 = arith.constant 0 : index
    %c0_13 = arith.constant 0 : index
    %10 = vector.load %arg8[%c0_12, %c0_13] : memref<1x128xf32, #tpu.memory_space<vmem>>, vector<1x128xf32>
    %11 = arith.mulf %10, %1 : vector<1x128xf32>
    %12 = arith.addf %9, %11 : vector<1x128xf32>
    %13 = vector.broadcast %1 : vector<1x128xf32> to vector<8x128xf32>
    %14 = arith.mulf %8, %13 : vector<8x128xf32>
    %15 = arith.addf %3, %14 : vector<8x128xf32>
    %16 = vector.broadcast %12 : vector<1x128xf32> to vector<8x128xf32>
    %17 = arith.addf %15, %16 : vector<8x128xf32>
    %c0_14 = arith.constant 0 : index
    %c0_15 = arith.constant 0 : index
    %18 = vector.load %arg9[%c0_14, %c0_15] : memref<8x128xf32, #tpu.memory_space<vmem>>, vector<8x128xf32>
    tpu.vector_store %arg9[%c0_14, %c0_15], %17 {strides = array<i32>} : memref<8x128xf32, #tpu.memory_space<vmem>>, vector<8x128xf32>,
    return
  }
  func.func @transform_0(%arg0: i32, %arg1: i32) -> (i32, i32) {
    %c0_i32 = arith.constant 0 : i32
    %c0_i32_0 = arith.constant 0 : i32
    return %arg1, %c0_i32 : i32, i32
  }
  func.func @transform_1(%arg0: i32, %arg1: i32) -> (i32, i32) {
    %c0_i32 = arith.constant 0 : i32
    %c0_i32_0 = arith.constant 0 : i32
    return %c0_i32, %arg0 : i32, i32
  }
  func.func @transform_2(%arg0: i32, %arg1: i32) -> (i32, i32) {
    %c0_i32 = arith.constant 0 : i32
    %c0_i32_0 = arith.constant 0 : i32
    return %c0_i32, %arg0 : i32, i32
  }
  func.func @transform_3(%arg0: i32, %arg1: i32) -> (i32, i32) {
    %c0_i32 = arith.constant 0 : i32
    %c0_i32_0 = arith.constant 0 : i32
    %c0_i32_1 = arith.constant 0 : i32
    return %c0_i32, %c0_i32_0 : i32, i32
  }
  func.func @transform_4(%arg0: i32, %arg1: i32) -> (i32, i32) {
    %c0_i32 = arith.constant 0 : i32
    %c0_i32_0 = arith.constant 0 : i32
    return %c0_i32, %arg0 : i32, i32
  }
  func.func @transform_5(%arg0: i32, %arg1: i32) -> (i32, i32) {
    %c0_i32 = arith.constant 0 : i32
    %c0_i32_0 = arith.constant 0 : i32
    return %c0_i32, %arg0 : i32, i32
  }
  func.func @transform_6(%arg0: i32, %arg1: i32) -> (i32, i32) {
    %c0_i32 = arith.constant 0 : i32
    %c0_i32_0 = arith.constant 0 : i32
    return %c0_i32, %arg0 : i32, i32
  }
  func.func @transform_7(%arg0: i32, %arg1: i32) -> (i32, i32) {
    %c0_i32 = arith.constant 0 : i32
    return %arg1, %arg0 : i32, i32
  }
}

module attributes {stable_mosaic.version = 11 : i64} {
  func.func @_noisy_linear_train_kernel(%arg0: i32, %arg1: i32, %arg2: memref<8x512xf32, #tpu.memory_space<vmem>>, %arg3: memref<512x128xf32, #tpu.memory_space<vmem>>, %arg4: memref<512x128xf32, #tpu.memory_space<vmem>>, %arg5: memref<1x512xf32, #tpu.memory_space<vmem>>, %arg6: memref<1x128xf32, #tpu.memory_space<vmem>>, %arg7: memref<1x128xf32, #tpu.memory_space<vmem>>, %arg8: memref<1x128xf32, #tpu.memory_space<vmem>>, %arg9: memref<8x128xf32, #tpu.memory_space<vmem>>) attributes {dimension_semantics = [#tpu.dimension_semantics<parallel>, #tpu.dimension_semantics<parallel>], iteration_bounds = array<i64: 1, 2>, scalar_prefetch = 0 : i64, scratch_operands = 0 : i64, tpu.core_type = #tpu.core_type<tc>, window_params = [{transform_indices = @transform_0, window_bounds = array<i64: 8, 512>}, {transform_indices = @transform_1, window_bounds = array<i64: 512, 128>}, {transform_indices = @transform_2, window_bounds = array<i64: 512, 128>}, {pipeline_mode = #tpu.pipeline_mode<synchronous>, transform_indices = @transform_3, window_bounds = array<i64: 1, 512>}, {transform_indices = @transform_4, window_bounds = array<i64: 1, 128>}, {transform_indices = @transform_5, window_bounds = array<i64: 1, 128>}, {transform_indices = @transform_6, window_bounds = array<i64: 1, 128>}, {transform_indices = @transform_7, window_bounds = array<i64: 8, 128>}]} {
    %c0 = arith.constant 0 : index
    %c0_0 = arith.constant 0 : index
    %0 = vector.load %arg2[%c0, %c0_0] : memref<8x512xf32, #tpu.memory_space<vmem>>, vector<8x512xf32>
    %c0_1 = arith.constant 0 : index
    %c0_2 = arith.constant 0 : index
    %1 = vector.load %arg6[%c0_1, %c0_2] : memref<1x128xf32, #tpu.memory_space<vmem>>, vector<1x128xf32>
    %c0_3 = arith.constant 0 : index
    %c0_4 = arith.constant 0 : index
    %2 = vector.load %arg3[%c0_3, %c0_4] : memref<512x128xf32, #tpu.memory_space<vmem>>, vector<512x128xf32>
    %cst = arith.constant dense<0.000000e+00> : vector<8x128xf32>
    %3 = tpu.matmul %0, %2, %cst {dimension_numbers = #tpu.dot_dimension_numbers<[1], [0], [0], [1], [0, 0, 1, 1], [], []>} : vector<8x512xf32>, vector<512x128xf32>, vector<8x128xf32> -> vector<8x128xf32>
    %c0_5 = arith.constant 0 : index
    %c0_6 = arith.constant 0 : index
    %4 = vector.load %arg5[%c0_5, %c0_6] : memref<1x512xf32, #tpu.memory_space<vmem>>, vector<1x512xf32>
    %5 = vector.broadcast %4 : vector<1x512xf32> to vector<8x512xf32>
    %6 = arith.mulf %0, %5 : vector<8x512xf32>
    %c0_7 = arith.constant 0 : index
    %c0_8 = arith.constant 0 : index
    %7 = vector.load %arg4[%c0_7, %c0_8] : memref<512x128xf32, #tpu.memory_space<vmem>>, vector<512x128xf32>
    %cst_9 = arith.constant dense<0.000000e+00> : vector<8x128xf32>
    %8 = tpu.matmul %6, %7, %cst_9 {dimension_numbers = #tpu.dot_dimension_numbers<[1], [0], [0], [1], [0, 0, 1, 1], [], []>} : vector<8x512xf32>, vector<512x128xf32>, vector<8x128xf32> -> vector<8x128xf32>
    %c0_10 = arith.constant 0 : index
    %c0_11 = arith.constant 0 : index
    %9 = vector.load %arg7[%c0_10, %c0_11] : memref<1x128xf32, #tpu.memory_space<vmem>>, vector<1x128xf32>
    %c0_12 = arith.constant 0 : index
    %c0_13 = arith.constant 0 : index
    %10 = vector.load %arg8[%c0_12, %c0_13] : memref<1x128xf32, #tpu.memory_space<vmem>>, vector<1x128xf32>
    %11 = arith.mulf %10, %1 : vector<1x128xf32>
    %12 = arith.addf %9, %11 : vector<1x128xf32>
    %13 = vector.broadcast %1 : vector<1x128xf32> to vector<8x128xf32>
    %14 = arith.mulf %8, %13 : vector<8x128xf32>
    %15 = arith.addf %3, %14 : vector<8x128xf32>
    %16 = vector.broadcast %12 : vector<1x128xf32> to vector<8x128xf32>
    %17 = arith.addf %15, %16 : vector<8x128xf32>
    %c0_14 = arith.constant 0 : index
    %c0_15 = arith.constant 0 : index
    %18 = vector.load %arg9[%c0_14, %c0_15] : memref<8x128xf32, #tpu.memory_space<vmem>>, vector<8x128xf32>
    tpu.vector_store %arg9[%c0_14, %c0_15], %17 {strides = array<i32>} : memref<8x128xf32, #tpu.memory_space<vmem>>, vector<8x128xf32>,
    return
  }
  func.func @transform_0(%arg0: i32, %arg1: i32) -> (i32, i32) {
    %c0_i32 = arith.constant 0 : i32
    %c0_i32_0 = arith.constant 0 : i32
    return %arg1, %c0_i32 : i32, i32
  }
  func.func @transform_1(%arg0: i32, %arg1: i32) -> (i32, i32) {
    %c0_i32 = arith.constant 0 : i32
    %c0_i32_0 = arith.constant 0 : i32
    return %c0_i32, %arg0 : i32, i32
  }
  func.func @transform_2(%arg0: i32, %arg1: i32) -> (i32, i32) {
    %c0_i32 = arith.constant 0 : i32
    %c0_i32_0 = arith.constant 0 : i32
    return %c0_i32, %arg0 : i32, i32
  }
  func.func @transform_3(%arg0: i32, %arg1: i32) -> (i32, i32) {
    %c0_i32 = arith.constant 0 : i32
    %c0_i32_0 = arith.constant 0 : i32
    %c0_i32_1 = arith.constant 0 : i32
    return %c0_i32, %c0_i32_0 : i32, i32
  }
  func.func @transform_4(%arg0: i32, %arg1: i32) -> (i32, i32) {
    %c0_i32 = arith.constant 0 : i32
    %c0_i32_0 = arith.constant 0 : i32
    return %c0_i32, %arg0 : i32, i32
  }
  func.func @transform_5(%arg0: i32, %arg1: i32) -> (i32, i32) {
    %c0_i32 = arith.constant 0 : i32
    %c0_i32_0 = arith.constant 0 : i32
    return %c0_i32, %arg0 : i32, i32
  }
  func.func @transform_6(%arg0: i32, %arg1: i32) -> (i32, i32) {
    %c0_i32 = arith.constant 0 : i32
    %c0_i32_0 = arith.constant 0 : i32
    return %c0_i32, %arg0 : i32, i32
  }
  func.func @transform_7(%arg0: i32, %arg1: i32) -> (i32, i32) {
    %c0_i32 = arith.constant 0 : i32
    return %arg1, %arg0 : i32, i32
  }
}

</mosaic_0001>

<llo_original>
// kernel: tpu_custom_call.1
$region0: #{tpu_custom_call.1}
  #allocation0 [shape = 'u32[]', space=smem, size = 0x4, offset = 0x4, fixed_abs, tag = 'smem constant byte address 0x4 - core index']
  #allocation1 [shape = 'u32[144,128]{1,0:T(1,128)}', space=vmem, size = 0x12000, scoped, tag = 'internal scratch']
  %s0 = inlined_call_operand.hbm [shape: f32[16,512], index: 0, kind: input, shape index: {}]
  %s1 = inlined_call_operand.hbm [shape: f32[512,128], index: 1, kind: input, shape index: {}]
  %s2 = inlined_call_operand.hbm [shape: f32[512,128], index: 2, kind: input, shape index: {}]
  %s3 = inlined_call_operand.vmem [shape: f32[1,512], index: 3, kind: input, shape index: {}]
  %s4 = inlined_call_operand.vmem [shape: f32[1,128], index: 4, kind: input, shape index: {}]
  %s5 = inlined_call_operand.vmem [shape: f32[1,128], index: 5, kind: input, shape index: {}]
  %s6 = inlined_call_operand.vmem [shape: f32[1,128], index: 6, kind: input, shape index: {}]
  %s7 = inlined_call_operand.hbm [shape: f32[16,128], index: 7, kind: output, shape index: {}]
  %s8 = sld [smem:[#allocation0]]
  $region73: #{tpu_custom_call.1} parent=0
    _
  %s10 = ssub.s32 1, %s8
  %s11 = scalar_select 0, %s10, %s8
  $region1: #{tpu_custom_call.1} parent=0
    #allocation2 [shape = 'u8[32768]{0}', space=vmem, size = 0x8000, scoped, tag = 'input window, operand 0']
    #allocation3 [shape = 's32[2]{0}', space=sflag, size = 0x8, scoped, tag = 'scoped memory for tpu_custom_call.1']
    #allocation4 [shape = 's32[2]{0}', space=sflag, size = 0x8, scoped, tag = 'scoped memory for tpu_custom_call.1']
    #allocation5 [shape = 'u8[262144]{0}', space=vmem, size = 0x40000, scoped, tag = 'input window, operand 1, single buffered']
    #allocation6 [shape = 's32[1]{0}', space=sflag, size = 0x4, scoped, tag = 'scoped memory for tpu_custom_call.1']
    #allocation7 [shape = 'u8[262144]{0}', space=vmem, size = 0x40000, scoped, tag = 'input window, operand 2, single buffered']
    #allocation8 [shape = 'u8[8192]{0}', space=vmem, size = 0x2000, scoped, tag = 'output window, operand 0']
    %12 = vsyncpa [#allocation3], 0
    %s13 = scalar_lea.sflag [#allocation3], 1
    %14 = vsyncpa %s13, 0
    %15 = vsyncpa [#allocation6], 0
    %16 = vsyncpa [#allocation4], 0
    %s17 = scalar_lea.sflag [#allocation4], 1
    %18 = vsyncpa %s17, 0
    loop: start=0, step=1, limit=4
    $region2: #{tpu_custom_call.1} parent=1 // loop_pre_header
      _
    $region3: #{tpu_custom_call.1} parent=1 // loop_header
      %s20 = sphi 0, %s24
      %p21 = scmp.ge.s32.totalorder %s20, 4
      %s27 = sphi 0, %s39
      %s28 = sphi 0, %s35
      %s29 = sphi 0, %s27
      %s30 = sphi 0, %s28
      %s31 = sphi 0, %s29
      %s32 = sphi 0, %s30
      %s42 = sphi 0, %s44
      %s45 = sphi 0, %s42
      %s46 = sphi 0, %s45
      %s62 = sphi 0, %s46
      %s68 = sphi 0, %s70
      %s71 = sphi 0, %s68
      %s72 = sphi 0, %s71
      %s88 = sphi 0, %s72
      %s94 = sphi 0, %s96
      %s97 = sphi 0, %s94
      %s98 = sphi 0, %s97
      %s114 = sphi 0, %s98
      %s118 = sphi 0, %s118
      %s120 = sphi 0, %s118
      %s121 = sphi 0, %s120
      %s135 = sphi 0, %s121
      %s141 = sphi 0, %s143
      %s144 = sphi 0, %s141
      %s145 = sphi 0, %s144
      %s161 = sphi 0, %s145
      %s167 = sphi 0, %s169
      %s170 = sphi 0, %s167
      %s171 = sphi 0, %s170
      %s187 = sphi 0, %s171
      %s193 = sphi 0, %s195
      %s196 = sphi 0, %s193
      %s197 = sphi 0, %s196
      %s213 = sphi 0, %s197
      %s221 = sphi 0, %s223
      %s224 = sphi 0, %s221
      %s225 = sphi 0, %s224
      %s241 = sphi 0, %s225
    $region4: #{tpu_custom_call.1} parent=1 // loop_header_branch
      %23 = sbr.rel (%p21) target = $region8
    $region5: #{tpu_custom_call.1} parent=1 // loop_body
      %s25 = ssub.s32 %s20, 1
      %s26 = ssub.s32 %s20, 2
      %s33 = sadd.s32 1, %s28
      %p34 = scmp.ge.s32.totalorder %s33, 2
      %s35 = scalar_select %p34, 0, %s33
      %s36 = sadd.s32 1, %s27
      %s37 = scalar_select %p34, %s36, %s27
      %p38 = scmp.ge.s32.totalorder %s37, 1
      %s39 = scalar_select %p38, 0, %s37
      %s40 = ssub.s32 %s28, %s35
      %p41 = scmp.eq.s32.totalorder %s40, 0
      %s43 = sadd.s32 %s42, 1
      %s44 = scalar_select %p41, %s42, %s43
      %p47 = pneg %p41
      %p48 = scmp.eq.s32.totalorder %s20, 1
      %p49 = por %p47, %p48
      %p50 = scmp.ne.s32.totalorder %s42, %s45
      %p51 = scmp.eq.s32.totalorder %s20, 0
      %p52 = por %p50, %p51
      %p53 = scmp.ne.s32.totalorder %s42, %s45
      %p54 = scmp.eq.s32.totalorder %s25, 1
      %p55 = por %p53, %p54
      %p56 = scmp.ne.s32.totalorder %s45, %s46
      %p57 = scmp.eq.s32.totalorder %s25, 0
      %p58 = por %p56, %p57
      %p59 = scmp.ne.s32.totalorder %s45, %s46
      %p60 = scmp.eq.s32.totalorder %s26, 1
      %p61 = por %p59, %p60
      %p63 = scmp.ne.s32.totalorder %s46, %s62
      %p64 = scmp.eq.s32.totalorder %s26, 0
      %p65 = por %p63, %p64
      %s66 = ssub.s32 %s27, %s39
      %p67 = scmp.eq.s32.totalorder %s66, 0
      %s69 = sadd.s32 %s68, 1
      %s70 = scalar_select %p67, %s68, %s69
      %p73 = pneg %p67
      %p74 = scmp.eq.s32.totalorder %s20, 1
      %p75 = por %p73, %p74
      %p76 = scmp.ne.s32.totalorder %s68, %s71
      %p77 = scmp.eq.s32.totalorder %s20, 0
      %p78 = por %p76, %p77
      %p79 = scmp.ne.s32.totalorder %s68, %s71
      %p80 = scmp.eq.s32.totalorder %s25, 1
      %p81 = por %p79, %p80
      %p82 = scmp.ne.s32.totalorder %s71, %s72
      %p83 = scmp.eq.s32.totalorder %s25, 0
      %p84 = por %p82, %p83
      %p85 = scmp.ne.s32.totalorder %s71, %s72
      %p86 = scmp.eq.s32.totalorder %s26, 1
      %p87 = por %p85, %p86
      %p89 = scmp.ne.s32.totalorder %s72, %s88
      %p90 = scmp.eq.s32.totalorder %s26, 0
      %p91 = por %p89, %p90
      %s92 = ssub.s32 %s27, %s39
      %p93 = scmp.eq.s32.totalorder %s92, 0
      %s95 = sadd.s32 %s94, 1
      %s96 = scalar_select %p93, %s94, %s95
      %p99 = pneg %p93
      %p100 = scmp.eq.s32.totalorder %s20, 1
      %p101 = por %p99, %p100
      %p102 = scmp.ne.s32.totalorder %s94, %s97
      %p103 = scmp.eq.s32.totalorder %s20, 0
      %p104 = por %p102, %p103
      %p105 = scmp.ne.s32.totalorder %s94, %s97
      %p106 = scmp.eq.s32.totalorder %s25, 1
      %p107 = por %p105, %p106
      %p108 = scmp.ne.s32.totalorder %s97, %s98
      %p109 = scmp.eq.s32.totalorder %s25, 0
      %p110 = por %p108, %p109
      %p111 = scmp.ne.s32.totalorder %s97, %s98
      %p112 = scmp.eq.s32.totalorder %s26, 1
      %p113 = por %p111, %p112
      %p115 = scmp.ne.s32.totalorder %s98, %s114
      %p116 = scmp.eq.s32.totalorder %s26, 0
      %p117 = por %p115, %p116
      %s119 = sadd.s32 %s118, 1
      %p122 = scmp.eq.s32.totalorder %s20, 1
      %p123 = scmp.ne.s32.totalorder %s118, %s120
      %p124 = scmp.eq.s32.totalorder %s20, 0
      %p125 = por %p123, %p124
      %p126 = scmp.ne.s32.totalorder %s118, %s120
      %p127 = scmp.eq.s32.totalorder %s25, 1
      %p128 = por %p126, %p127
      %p129 = scmp.ne.s32.totalorder %s120, %s121
      %p130 = scmp.eq.s32.totalorder %s25, 0
      %p131 = por %p129, %p130
      %p132 = scmp.ne.s32.totalorder %s120, %s121
      %p133 = scmp.eq.s32.totalorder %s26, 1
      %p134 = por %p132, %p133
      %p136 = scmp.ne.s32.totalorder %s121, %s135
      %p137 = scmp.eq.s32.totalorder %s26, 0
      %p138 = por %p136, %p137
      %s139 = ssub.s32 %s27, %s39
      %p140 = scmp.eq.s32.totalorder %s139, 0
      %s142 = sadd.s32 %s141, 1
      %s143 = scalar_select %p140, %s141, %s142
      %p146 = pneg %p140
      %p147 = scmp.eq.s32.totalorder %s20, 1
      %p148 = por %p146, %p147
      %p149 = scmp.ne.s32.totalorder %s141, %s144
      %p150 = scmp.eq.s32.totalorder %s20, 0
      %p151 = por %p149, %p150
      %p152 = scmp.ne.s32.totalorder %s141, %s144
      %p153 = scmp.eq.s32.totalorder %s25, 1
      %p154 = por %p152, %p153
      %p155 = scmp.ne.s32.totalorder %s144, %s145
      %p156 = scmp.eq.s32.totalorder %s25, 0
      %p157 = por %p155, %p156
      %p158 = scmp.ne.s32.totalorder %s144, %s145
      %p159 = scmp.eq.s32.totalorder %s26, 1
      %p160 = por %p158, %p159
      %p162 = scmp.ne.s32.totalorder %s145, %s161
      %p163 = scmp.eq.s32.totalorder %s26, 0
      %p164 = por %p162, %p163
      %s165 = ssub.s32 %s27, %s39
      %p166 = scmp.eq.s32.totalorder %s165, 0
      %s168 = sadd.s32 %s167, 1
      %s169 = scalar_select %p166, %s167, %s168
      %p172 = pneg %p166
      %p173 = scmp.eq.s32.totalorder %s20, 1
      %p174 = por %p172, %p173
      %p175 = scmp.ne.s32.totalorder %s167, %s170
      %p176 = scmp.eq.s32.totalorder %s20, 0
      %p177 = por %p175, %p176
      %p178 = scmp.ne.s32.totalorder %s167, %s170
      %p179 = scmp.eq.s32.totalorder %s25, 1
      %p180 = por %p178, %p179
      %p181 = scmp.ne.s32.totalorder %s170, %s171
      %p182 = scmp.eq.s32.totalorder %s25, 0
      %p183 = por %p181, %p182
      %p184 = scmp.ne.s32.totalorder %s170, %s171
      %p185 = scmp.eq.s32.totalorder %s26, 1
      %p186 = por %p184, %p185
      %p188 = scmp.ne.s32.totalorder %s171, %s187
      %p189 = scmp.eq.s32.totalorder %s26, 0
      %p190 = por %p188, %p189
      %s191 = ssub.s32 %s27, %s39
      %p192 = scmp.eq.s32.totalorder %s191, 0
      %s194 = sadd.s32 %s193, 1
      %s195 = scalar_select %p192, %s193, %s194
      %p198 = pneg %p192
      %p199 = scmp.eq.s32.totalorder %s20, 1
      %p200 = por %p198, %p199
      %p201 = scmp.ne.s32.totalorder %s193, %s196
      %p202 = scmp.eq.s32.totalorder %s20, 0
      %p203 = por %p201, %p202
      %p204 = scmp.ne.s32.totalorder %s193, %s196
      %p205 = scmp.eq.s32.totalorder %s25, 1
      %p206 = por %p204, %p205
      %p207 = scmp.ne.s32.totalorder %s196, %s197
      %p208 = scmp.eq.s32.totalorder %s25, 0
      %p209 = por %p207, %p208
      %p210 = scmp.ne.s32.totalorder %s196, %s197
      %p211 = scmp.eq.s32.totalorder %s26, 1
      %p212 = por %p210, %p211
      %p214 = scmp.ne.s32.totalorder %s197, %s213
      %p215 = scmp.eq.s32.totalorder %s26, 0
      %p216 = por %p214, %p215
      %s217 = ssub.s32 %s28, %s35
      %s218 = ssub.s32 %s27, %s39
      %s219 = sor.u32 %s217, %s218
      %p220 = scmp.eq.s32.totalorder %s219, 0
      %s222 = sadd.s32 %s221, 1
      %s223 = scalar_select %p220, %s221, %s222
      %p226 = pneg %p220
      %p227 = scmp.eq.s32.totalorder %s20, 1
      %p228 = por %p226, %p227
      %p229 = scmp.ne.s32.totalorder %s221, %s224
      %p230 = scmp.eq.s32.totalorder %s20, 0
      %p231 = por %p229, %p230
      %p232 = scmp.ne.s32.totalorder %s221, %s224
      %p233 = scmp.eq.s32.totalorder %s25, 1
      %p234 = por %p232, %p233
      %p235 = scmp.ne.s32.totalorder %s224, %s225
      %p236 = scmp.eq.s32.totalorder %s25, 0
      %p237 = por %p235, %p236
      %p238 = scmp.ne.s32.totalorder %s224, %s225
      %p239 = scmp.eq.s32.totalorder %s26, 1
      %p240 = por %p238, %p239
      %p242 = scmp.ne.s32.totalorder %s225, %s241
      %p243 = scmp.eq.s32.totalorder %s26, 0
      %p244 = por %p242, %p243
      %p245 = scmp.le.s32.totalorder 1, %s20
      %p246 = scmp.lt.s32.totalorder %s20, 3
      %p247 = pnand %p245, %p246
      %p248 = pneg %p247
      // Predicated region
      $region9: #{tpu_custom_call.1} parent=5 // pred_check
        _
      $region10: #{tpu_custom_call.1} parent=5 // pred_check_branch
        %250 = sbr.rel (%p247) target = $region12
      $region11: #{tpu_custom_call.1} parent=5 // pred_region
        %s251 = ssub.s32 %s20, 1
        // Predicated region
        $region13: #{tpu_custom_call.1} parent=11 // pred_check
          %p252 = pneg %p84
        $region14: #{tpu_custom_call.1} parent=11 // pred_check_branch
          %254 = sbr.rel (%p252) target = $region16
        $region15: #{tpu_custom_call.1} parent=11 // pred_region
          %s256 = ssub.s32 8192, 8192
          %257 = vsyncadd [#allocation6], %s256
          %s258 = smul.addr %s29, 128
          %s259 = scalar_lea.hbm %s1, %s258
          %s260 = sshll.u32 [#allocation5], 4
          %s261 = int_to_ptr.vmem [resolvable:$true] %s260
          %266 = dma.hbm_to_vmem [thread:$0]  %s259, 8192, %s261, [#allocation6], 128, 128, 8
        $region16: #{tpu_custom_call.1} parent=11 // pred_fallthru
          _
        // Predicated region
        $region17: #{tpu_custom_call.1} parent=11 // pred_check
          %p267 = pneg %p110
        $region18: #{tpu_custom_call.1} parent=11 // pred_check_branch
          %269 = sbr.rel (%p267) target = $region20
        $region19: #{tpu_custom_call.1} parent=11 // pred_region
          %s271 = ssub.s32 8192, 8192
          %272 = vsyncadd [#allocation6], %s271
          %s273 = smul.addr %s29, 128
          %s274 = scalar_lea.hbm %s2, %s273
          %s275 = sshll.u32 [#allocation7], 4
          %s276 = int_to_ptr.vmem [resolvable:$true] %s275
          %281 = dma.hbm_to_vmem [thread:$0]  %s274, 8192, %s276, [#allocation6], 128, 128, 8
        $region20: #{tpu_custom_call.1} parent=11 // pred_fallthru
          _
        // Predicated region
        $region21: #{tpu_custom_call.1} parent=11 // pred_check
          %p282 = pneg %p131
        $region22: #{tpu_custom_call.1} parent=11 // pred_check_branch
          %284 = sbr.rel (%p282) target = $region24
        $region23: #{tpu_custom_call.1} parent=11 // pred_region
          _
        $region24: #{tpu_custom_call.1} parent=11 // pred_fallthru
          _
        // Predicated region
        $region25: #{tpu_custom_call.1} parent=11 // pred_check
          %p285 = pneg %p157
        $region26: #{tpu_custom_call.1} parent=11 // pred_check_branch
          %287 = sbr.rel (%p285) target = $region28
        $region27: #{tpu_custom_call.1} parent=11 // pred_region
          %p288 = scmp.lt.s32.totalorder %s29, 0
          %s289 = scalar_select %p288, %s29, 0
          %s290 = scalar_lea.vmem %s4, %s289
        $region28: #{tpu_custom_call.1} parent=11 // pred_fallthru
          _
        // Predicated region
        $region29: #{tpu_custom_call.1} parent=11 // pred_check
          %p291 = pneg %p183
        $region30: #{tpu_custom_call.1} parent=11 // pred_check_branch
          %293 = sbr.rel (%p291) target = $region32
        $region31: #{tpu_custom_call.1} parent=11 // pred_region
          %p294 = scmp.lt.s32.totalorder %s29, 0
          %s295 = scalar_select %p294, %s29, 0
          %s296 = scalar_lea.vmem %s5, %s295
        $region32: #{tpu_custom_call.1} parent=11 // pred_fallthru
          _
        // Predicated region
        $region33: #{tpu_custom_call.1} parent=11 // pred_check
          %p297 = pneg %p209
        $region34: #{tpu_custom_call.1} parent=11 // pred_check_branch
          %299 = sbr.rel (%p297) target = $region36
        $region35: #{tpu_custom_call.1} parent=11 // pred_region
          %p300 = scmp.lt.s32.totalorder %s29, 0
          %s301 = scalar_select %p300, %s29, 0
          %s302 = scalar_lea.vmem %s6, %s301
        $region36: #{tpu_custom_call.1} parent=11 // pred_fallthru
          _
      $region12: #{tpu_custom_call.1} parent=5 // pred_fallthru
        _
      %p303 = scmp.lt.s32.totalorder %s20, 2
      // Predicated region
      $region37: #{tpu_custom_call.1} parent=5 // pred_check
        %p304 = pneg %p303
      $region38: #{tpu_custom_call.1} parent=5 // pred_check_branch
        %306 = sbr.rel (%p304) target = $region40
      $region39: #{tpu_custom_call.1} parent=5 // pred_region
        // Predicated region
        $region41: #{tpu_custom_call.1} parent=39 // pred_check
          %p307 = pneg %p52
        $region42: #{tpu_custom_call.1} parent=39 // pred_check_branch
          %309 = sbr.rel (%p307) target = $region44
        $region43: #{tpu_custom_call.1} parent=39 // pred_region
          %s310 = sand.u32 %s42, 1
          %s311 = scalar_lea.sflag [#allocation3], %s310
          %s312 = sand.u32 %s42, 1
          %s313 = smul.addr %s312, 32
          %s314 = scalar_lea.vmem [#allocation2], %s313
          %s316 = ssub.s32 512, 512
          %317 = vsyncadd %s311, %s316
          %s318 = smul.addr %s28, 4
          %s319 = smul.addr %s318, 128
          %s320 = scalar_lea.hbm %s0, %s319
          %s322 = sshll.u32 %s314, 4
          %s323 = int_to_ptr.vmem [resolvable:$true] %s322
          %325 = dma.hbm_to_vmem [thread:$0]  %s320, 512, %s323, %s311
        $region44: #{tpu_custom_call.1} parent=39 // pred_fallthru
          _
      $region40: #{tpu_custom_call.1} parent=5 // pred_fallthru
        _
      %p326 = scmp.le.s32.totalorder 1, %s20
      %p327 = scmp.lt.s32.totalorder %s20, 3
      %p328 = pnand %p326, %p327
      %p329 = pneg %p328
      // Predicated region
      $region45: #{tpu_custom_call.1} parent=5 // pred_check
        _
      $region46: #{tpu_custom_call.1} parent=5 // pred_check_branch
        %331 = sbr.rel (%p328) target = $region48
      $region47: #{tpu_custom_call.1} parent=5 // pred_region
        %s332 = ssub.s32 %s20, 1
        %s333 = sand.u32 %s45, 1
        %s334 = scalar_lea.sflag [#allocation3], %s333
        %s335 = sand.u32 %s45, 1
        %s336 = smul.addr %s335, 32
        %s337 = scalar_lea.vmem [#allocation2], %s336
        // Predicated region
        $region49: #{tpu_custom_call.1} parent=47 // pred_check
          %p338 = pneg %p58
        $region50: #{tpu_custom_call.1} parent=47 // pred_check_branch
          %340 = sbr.rel (%p338) target = $region52
        $region51: #{tpu_custom_call.1} parent=47 // pred_region
          %341 = dma.done %s334, 512
        $region52: #{tpu_custom_call.1} parent=47 // pred_fallthru
          _
        // Predicated region
        $region53: #{tpu_custom_call.1} parent=47 // pred_check
          %p342 = pneg %p84
        $region54: #{tpu_custom_call.1} parent=47 // pred_check_branch
          %344 = sbr.rel (%p342) target = $region56
        $region55: #{tpu_custom_call.1} parent=47 // pred_region
          %345 = dma.done [#allocation6], 8192
        $region56: #{tpu_custom_call.1} parent=47 // pred_fallthru
          _
        // Predicated region
        $region57: #{tpu_custom_call.1} parent=47 // pred_check
          %p346 = pneg %p110
        $region58: #{tpu_custom_call.1} parent=47 // pred_check_branch
          %348 = sbr.rel (%p346) target = $region60
        $region59: #{tpu_custom_call.1} parent=47 // pred_region
          %349 = dma.done [#allocation6], 8192
        $region60: #{tpu_custom_call.1} parent=47 // pred_fallthru
          _
        %s350 = sand.u32 %s45, 1
        %s351 = scalar_lea.sflag [#allocation3], %s350
        %s352 = sand.u32 %s45, 1
        %s353 = smul.addr %s352, 32
        %s354 = scalar_lea.vmem [#allocation2], %s353
        %p355 = pneg %p58
        %p356 = pneg %p55
        %p357 = pneg %p84
        %p358 = pneg %p81
        %p359 = pneg %p110
        %p360 = pneg %p107
        %p361 = pneg %p131
        %p362 = pneg %p128
        %p363 = scmp.lt.s32.totalorder %s29, 0
        %s364 = scalar_select %p363, %s29, 0
        %s365 = scalar_lea.vmem %s4, %s364
        %p366 = pneg %p157
        %p367 = pneg %p154
        %p368 = scmp.lt.s32.totalorder %s29, 0
        %s369 = scalar_select %p368, %s29, 0
        %s370 = scalar_lea.vmem %s5, %s369
        %p371 = pneg %p183
        %p372 = pneg %p180
        %p373 = scmp.lt.s32.totalorder %s29, 0
        %s374 = scalar_select %p373, %s29, 0
        %s375 = scalar_lea.vmem %s6, %s374
        %p376 = pneg %p209
        %p377 = pneg %p206
        %p378 = pneg %p237
        %p379 = pneg %p234
        %s380 = sand.u32 %s224, 1
        %s381 = scalar_lea.sflag [#allocation4], %s380
        %s382 = sand.u32 %s224, 1
        %s383 = smul.addr %s382, 8
        %s384 = scalar_lea.vmem [#allocation8], %s383
        %p385 = scmp.lt.s32.totalorder %s29, 0
        %s386 = scalar_select %p385, %s29, 0
        %s387 = scalar_lea.vmem %s4, %s386
        %p388 = scmp.lt.s32.totalorder %s29, 0
        %s389 = scalar_select %p388, %s29, 0
        %s390 = scalar_lea.vmem %s5, %s389
        %p391 = scmp.lt.s32.totalorder %s29, 0
        %s392 = scalar_select %p391, %s29, 0
        %s393 = scalar_lea.vmem %s6, %s392
        %v394 = vld [vmem:[%s337] sm:$0xff]
        %v395 = vld [vmem:[%s337 + $0x8] sm:$0xff]
        %v396 = vld [vmem:[%s337 + $0x10] sm:$0xff]
        %v397 = vld [vmem:[%s337 + $0x18] sm:$0xff]
        %v398 = vld [vmem:[%s387] sm:$0x1]
        %v399 = vld [vmem:[#allocation5] sm:$0xff]
        %v400 = vld [vmem:[#allocation5 + $0x8] sm:$0xff]
        %v401 = vld [vmem:[#allocation5 + $0x10] sm:$0xff]
        %v402 = vld [vmem:[#allocation5 + $0x18] sm:$0xff]
        %v403 = vld [vmem:[#allocation5 + $0x20] sm:$0xff]
        %v404 = vld [vmem:[#allocation5 + $0x28] sm:$0xff]
        %v405 = vld [vmem:[#allocation5 + $0x30] sm:$0xff]
        %v406 = vld [vmem:[#allocation5 + $0x38] sm:$0xff]
        %v407 = vld [vmem:[#allocation5 + $0x40] sm:$0xff]
        %v408 = vld [vmem:[#allocation5 + $0x48] sm:$0xff]
        %v409 = vld [vmem:[#allocation5 + $0x50] sm:$0xff]
        %v410 = vld [vmem:[#allocation5 + $0x58] sm:$0xff]
        %v411 = vld [vmem:[#allocation5 + $0x60] sm:$0xff]
        %v412 = vld [vmem:[#allocation5 + $0x68] sm:$0xff]
        %v413 = vld [vmem:[#allocation5 + $0x70] sm:$0xff]
        %v414 = vld [vmem:[#allocation5 + $0x78] sm:$0xff]
        %v415 = vld [vmem:[#allocation5 + $0x80] sm:$0xff]
        %v416 = vld [vmem:[#allocation5 + $0x88] sm:$0xff]
        %v417 = vld [vmem:[#allocation5 + $0x90] sm:$0xff]
        %v418 = vld [vmem:[#allocation5 + $0x98] sm:$0xff]
        %v419 = vld [vmem:[#allocation5 + $0xa0] sm:$0xff]
        %v420 = vld [vmem:[#allocation5 + $0xa8] sm:$0xff]
        %v421 = vld [vmem:[#allocation5 + $0xb0] sm:$0xff]
        %v422 = vld [vmem:[#allocation5 + $0xb8] sm:$0xff]
        %v423 = vld [vmem:[#allocation5 + $0xc0] sm:$0xff]
        %v424 = vld [vmem:[#allocation5 + $0xc8] sm:$0xff]
        %v425 = vld [vmem:[#allocation5 + $0xd0] sm:$0xff]
        %v426 = vld [vmem:[#allocation5 + $0xd8] sm:$0xff]
        %v427 = vld [vmem:[#allocation5 + $0xe0] sm:$0xff]
        %v428 = vld [vmem:[#allocation5 + $0xe8] sm:$0xff]
        %v429 = vld [vmem:[#allocation5 + $0xf0] sm:$0xff]
        %v430 = vld [vmem:[#allocation5 + $0xf8] sm:$0xff]
        %v431 = vld [vmem:[#allocation5 + $0x100] sm:$0xff]
        %v432 = vld [vmem:[#allocation5 + $0x108] sm:$0xff]
        %v433 = vld [vmem:[#allocation5 + $0x110] sm:$0xff]
        %v434 = vld [vmem:[#allocation5 + $0x118] sm:$0xff]
        %v435 = vld [vmem:[#allocation5 + $0x120] sm:$0xff]
        %v436 = vld [vmem:[#allocation5 + $0x128] sm:$0xff]
        %v437 = vld [vmem:[#allocation5 + $0x130] sm:$0xff]
        %v438 = vld [vmem:[#allocation5 + $0x138] sm:$0xff]
        %v439 = vld [vmem:[#allocation5 + $0x140] sm:$0xff]
        %v440 = vld [vmem:[#allocation5 + $0x148] sm:$0xff]
        %v441 = vld [vmem:[#allocation5 + $0x150] sm:$0xff]
        %v442 = vld [vmem:[#allocation5 + $0x158] sm:$0xff]
        %v443 = vld [vmem:[#allocation5 + $0x160] sm:$0xff]
        %v444 = vld [vmem:[#allocation5 + $0x168] sm:$0xff]
        %v445 = vld [vmem:[#allocation5 + $0x170] sm:$0xff]
        %v446 = vld [vmem:[#allocation5 + $0x178] sm:$0xff]
        %v447 = vld [vmem:[#allocation5 + $0x180] sm:$0xff]
        %v448 = vld [vmem:[#allocation5 + $0x188] sm:$0xff]
        %v449 = vld [vmem:[#allocation5 + $0x190] sm:$0xff]
        %v450 = vld [vmem:[#allocation5 + $0x198] sm:$0xff]
        %v451 = vld [vmem:[#allocation5 + $0x1a0] sm:$0xff]
        %v452 = vld [vmem:[#allocation5 + $0x1a8] sm:$0xff]
        %v453 = vld [vmem:[#allocation5 + $0x1b0] sm:$0xff]
        %v454 = vld [vmem:[#allocation5 + $0x1b8] sm:$0xff]
        %v455 = vld [vmem:[#allocation5 + $0x1c0] sm:$0xff]
        %v456 = vld [vmem:[#allocation5 + $0x1c8] sm:$0xff]
        %v457 = vld [vmem:[#allocation5 + $0x1d0] sm:$0xff]
        %v458 = vld [vmem:[#allocation5 + $0x1d8] sm:$0xff]
        %v459 = vld [vmem:[#allocation5 + $0x1e0] sm:$0xff]
        %v460 = vld [vmem:[#allocation5 + $0x1e8] sm:$0xff]
        %v461 = vld [vmem:[#allocation5 + $0x1f0] sm:$0xff]
        %v462 = vld [vmem:[#allocation5 + $0x1f8] sm:$0xff]
        %v463 = vld [vmem:[%s3] sm:$0xf]
        %v465 = vlaneseq
        %v466 = vshrl.u32 %v465, 7
        %v467 = vsub.s32 0, %v466
        %v468 = vrot.slane %v463, %v467
        %v469 = vlaneseq
        %v470 = vshrl.u32 %v469, 7
        %v471 = vsub.s32 1, %v470
        %v472 = vrot.slane %v463, %v471
        %v473 = vlaneseq
        %v474 = vshrl.u32 %v473, 7
        %v475 = vsub.s32 2, %v474
        %v476 = vrot.slane %v463, %v475
        %v477 = vlaneseq
        %v478 = vshrl.u32 %v477, 7
        %v479 = vsub.s32 3, %v478
        %v480 = vrot.slane %v463, %v479
        %v485 = vmul.f32 %v394, %v468
        %v486 = vmul.f32 %v395, %v472
        %v487 = vmul.f32 %v396, %v476
        %v488 = vmul.f32 %v397, %v480
        %v489 = vld [vmem:[#allocation7] sm:$0xff]
        %v490 = vld [vmem:[#allocation7 + $0x8] sm:$0xff]
        %v491 = vld [vmem:[#allocation7 + $0x10] sm:$0xff]
        %v492 = vld [vmem:[#allocation7 + $0x18] sm:$0xff]
        %v493 = vld [vmem:[#allocation7 + $0x20] sm:$0xff]
        %v494 = vld [vmem:[#allocation7 + $0x28] sm:$0xff]
        %v495 = vld [vmem:[#allocation7 + $0x30] sm:$0xff]
        %v496 = vld [vmem:[#allocation7 + $0x38] sm:$0xff]
        %v497 = vld [vmem:[#allocation7 + $0x40] sm:$0xff]
        %v498 = vld [vmem:[#allocation7 + $0x48] sm:$0xff]
        %v499 = vld [vmem:[#allocation7 + $0x50] sm:$0xff]
        %v500 = vld [vmem:[#allocation7 + $0x58] sm:$0xff]
        %v501 = vld [vmem:[#allocation7 + $0x60] sm:$0xff]
        %v502 = vld [vmem:[#allocation7 + $0x68] sm:$0xff]
        %v503 = vld [vmem:[#allocation7 + $0x70] sm:$0xff]
        %v504 = vld [vmem:[#allocation7 + $0x78] sm:$0xff]
        %v505 = vld [vmem:[#allocation7 + $0x80] sm:$0xff]
        %v506 = vld [vmem:[#allocation7 + $0x88] sm:$0xff]
        %v507 = vld [vmem:[#allocation7 + $0x90] sm:$0xff]
        %v508 = vld [vmem:[#allocation7 + $0x98] sm:$0xff]
        %v509 = vld [vmem:[#allocation7 + $0xa0] sm:$0xff]
        %v510 = vld [vmem:[#allocation7 + $0xa8] sm:$0xff]
        %v511 = vld [vmem:[#allocation7 + $0xb0] sm:$0xff]
        %v512 = vld [vmem:[#allocation7 + $0xb8] sm:$0xff]
        %v513 = vld [vmem:[#allocation7 + $0xc0] sm:$0xff]
        %v514 = vld [vmem:[#allocation7 + $0xc8] sm:$0xff]
        %v515 = vld [vmem:[#allocation7 + $0xd0] sm:$0xff]
        %v516 = vld [vmem:[#allocation7 + $0xd8] sm:$0xff]
        %v517 = vld [vmem:[#allocation7 + $0xe0] sm:$0xff]
        %v518 = vld [vmem:[#allocation7 + $0xe8] sm:$0xff]
        %v519 = vld [vmem:[#allocation7 + $0xf0] sm:$0xff]
        %v520 = vld [vmem:[#allocation7 + $0xf8] sm:$0xff]
        %v521 = vld [vmem:[#allocation7 + $0x100] sm:$0xff]
        %v522 = vld [vmem:[#allocation7 + $0x108] sm:$0xff]
        %v523 = vld [vmem:[#allocation7 + $0x110] sm:$0xff]
        %v524 = vld [vmem:[#allocation7 + $0x118] sm:$0xff]
        %v525 = vld [vmem:[#allocation7 + $0x120] sm:$0xff]
        %v526 = vld [vmem:[#allocation7 + $0x128] sm:$0xff]
        %v527 = vld [vmem:[#allocation7 + $0x130] sm:$0xff]
        %v528 = vld [vmem:[#allocation7 + $0x138] sm:$0xff]
        %v529 = vld [vmem:[#allocation7 + $0x140] sm:$0xff]
        %v530 = vld [vmem:[#allocation7 + $0x148] sm:$0xff]
        %v531 = vld [vmem:[#allocation7 + $0x150] sm:$0xff]
        %v532 = vld [vmem:[#allocation7 + $0x158] sm:$0xff]
        %v533 = vld [vmem:[#allocation7 + $0x160] sm:$0xff]
        %v534 = vld [vmem:[#allocation7 + $0x168] sm:$0xff]
        %v535 = vld [vmem:[#allocation7 + $0x170] sm:$0xff]
        %v536 = vld [vmem:[#allocation7 + $0x178] sm:$0xff]
        %v537 = vld [vmem:[#allocation7 + $0x180] sm:$0xff]
        %v538 = vld [vmem:[#allocation7 + $0x188] sm:$0xff]
        %v539 = vld [vmem:[#allocation7 + $0x190] sm:$0xff]
        %v540 = vld [vmem:[#allocation7 + $0x198] sm:$0xff]
        %v541 = vld [vmem:[#allocation7 + $0x1a0] sm:$0xff]
        %v542 = vld [vmem:[#allocation7 + $0x1a8] sm:$0xff]
        %v543 = vld [vmem:[#allocation7 + $0x1b0] sm:$0xff]
        %v544 = vld [vmem:[#allocation7 + $0x1b8] sm:$0xff]
        %v545 = vld [vmem:[#allocation7 + $0x1c0] sm:$0xff]
        %v546 = vld [vmem:[#allocation7 + $0x1c8] sm:$0xff]
        %v547 = vld [vmem:[#allocation7 + $0x1d0] sm:$0xff]
        %v548 = vld [vmem:[#allocation7 + $0x1d8] sm:$0xff]
        %v549 = vld [vmem:[#allocation7 + $0x1e0] sm:$0xff]
        %v550 = vld [vmem:[#allocation7 + $0x1e8] sm:$0xff]
        %v551 = vld [vmem:[#allocation7 + $0x1f0] sm:$0xff]
        %v552 = vld [vmem:[#allocation7 + $0x1f8] sm:$0xff]
        %553 = vmatprep.subr.mxu0 0.0
        %554 = vmatpush1.msra.mxu0 %v489
        %555 = vmatprep.subr.mxu0 0.0
        %556 = vmatpush1.msra.mxu0 %v490
        %557 = vmatprep.subr.mxu0 0.0
        %558 = vmatpush1.msra.mxu0 %v491
        %559 = vmatprep.subr.mxu0 0.0
        %560 = vmatpush1.msra.mxu0 %v492
        %561 = vmatprep.subr.mxu0 0.0
        %562 = vmatpush1.msra.mxu0 %v493
        %563 = vmatprep.subr.mxu0 0.0
        %564 = vmatpush1.msra.mxu0 %v494
        %565 = vmatprep.subr.mxu0 0.0
        %566 = vmatpush1.msra.mxu0 %v495
        %567 = vmatprep.subr.mxu0 0.0
        %568 = vmatpush1.msra.mxu0 %v496
        %569 = vmatprep.subr.mxu0 0.0
        %570 = vmatpush1.msra.mxu0 %v497
        %571 = vmatprep.subr.mxu0 0.0
        %572 = vmatpush1.msra.mxu0 %v498
        %573 = vmatprep.subr.mxu0 0.0
        %574 = vmatpush1.msra.mxu0 %v499
        %575 = vmatprep.subr.mxu0 0.0
        %576 = vmatpush1.msra.mxu0 %v500
        %577 = vmatprep.subr.mxu0 0.0
        %578 = vmatpush1.msra.mxu0 %v501
        %579 = vmatprep.subr.mxu0 0.0
        %580 = vmatpush1.msra.mxu0 %v502
        %581 = vmatprep.subr.mxu0 0.0
        %582 = vmatpush1.msra.mxu0 %v503
        %583 = vmatprep.subr.mxu0 0.0
        %584 = vmatpush1.msra.mxu0 %v504
        %585 = vmatprep.subr.mxu0 0.0
        %586 = vmatpush1.msra.mxu0 %v505
        %587 = vmatprep.subr.mxu0 0.0
        %588 = vmatpush1.msra.mxu0 %v506
        %589 = vmatprep.subr.mxu0 0.0
        %590 = vmatpush1.msra.mxu0 %v507
        %591 = vmatprep.subr.mxu0 0.0
        %592 = vmatpush1.msra.mxu0 %v508
        %593 = vmatprep.subr.mxu0 0.0
        %594 = vmatpush1.msra.mxu0 %v509
        %595 = vmatprep.subr.mxu0 0.0
        %596 = vmatpush1.msra.mxu0 %v510
        %597 = vmatprep.subr.mxu0 0.0
        %598 = vmatpush1.msra.mxu0 %v511
        %599 = vmatprep.subr.mxu0 0.0
        %600 = vmatpush1.msra.mxu0 %v512
        %601 = vmatprep.subr.mxu0 0.0
        %602 = vmatpush1.msra.mxu0 %v513
        %603 = vmatprep.subr.mxu0 0.0
        %604 = vmatpush1.msra.mxu0 %v514
        %605 = vmatprep.subr.mxu0 0.0
        %606 = vmatpush1.msra.mxu0 %v515
        %607 = vmatprep.subr.mxu0 0.0
        %608 = vmatpush1.msra.mxu0 %v516
        %609 = vmatprep.subr.mxu0 0.0
        %610 = vmatpush1.msra.mxu0 %v517
        %611 = vmatprep.subr.mxu0 0.0
        %612 = vmatpush1.msra.mxu0 %v518
        %613 = vmatprep.subr.mxu0 0.0
        %614 = vmatpush1.msra.mxu0 %v519
        %615 = vmatprep.subr.mxu0 0.0
        %616 = vmatpush1.msra.mxu0 %v520
        %617 = vmatprep.mubr.f32.mxu0 %v486
        %618 = vmatmul.mubr.f32.gmra.mrb[0].mxu0 %v485
        %v619 = vpop.f32.mrb[0].mxu0
        %v620 = vadd.f32 0.0, %v619
        %v621 = vpop.f32.mrb[0].mxu0
        %622 = vdwg.mxu0
        %623 = vmatprep.subr.mxu0 0.0
        %624 = vmatpush1.msra.mxu0 %v521
        %625 = vmatprep.subr.mxu0 0.0
        %626 = vmatpush1.msra.mxu0 %v522
        %627 = vmatprep.subr.mxu0 0.0
        %628 = vmatpush1.msra.mxu0 %v523
        %629 = vmatprep.subr.mxu0 0.0
        %630 = vmatpush1.msra.mxu0 %v524
        %631 = vmatprep.subr.mxu0 0.0
        %632 = vmatpush1.msra.mxu0 %v525
        %633 = vmatprep.subr.mxu0 0.0
        %634 = vmatpush1.msra.mxu0 %v526
        %635 = vmatprep.subr.mxu0 0.0
        %636 = vmatpush1.msra.mxu0 %v527
        %637 = vmatprep.subr.mxu0 0.0
        %638 = vmatpush1.msra.mxu0 %v528
        %639 = vmatprep.subr.mxu0 0.0
        %640 = vmatpush1.msra.mxu0 %v529
        %641 = vmatprep.subr.mxu0 0.0
        %642 = vmatpush1.msra.mxu0 %v530
        %643 = vmatprep.subr.mxu0 0.0
        %644 = vmatpush1.msra.mxu0 %v531
        %645 = vmatprep.subr.mxu0 0.0
        %646 = vmatpush1.msra.mxu0 %v532
        %647 = vmatprep.subr.mxu0 0.0
        %648 = vmatpush1.msra.mxu0 %v533
        %649 = vmatprep.subr.mxu0 0.0
        %650 = vmatpush1.msra.mxu0 %v534
        %651 = vmatprep.subr.mxu0 0.0
        %652 = vmatpush1.msra.mxu0 %v535
        %653 = vmatprep.subr.mxu0 0.0
        %654 = vmatpush1.msra.mxu0 %v536
        %655 = vmatprep.subr.mxu0 0.0
        %656 = vmatpush1.msra.mxu0 %v537
        %657 = vmatprep.subr.mxu0 0.0
        %658 = vmatpush1.msra.mxu0 %v538
        %659 = vmatprep.subr.mxu0 0.0
        %660 = vmatpush1.msra.mxu0 %v539
        %661 = vmatprep.subr.mxu0 0.0
        %662 = vmatpush1.msra.mxu0 %v540
        %663 = vmatprep.subr.mxu0 0.0
        %664 = vmatpush1.msra.mxu0 %v541
        %665 = vmatprep.subr.mxu0 0.0
        %666 = vmatpush1.msra.mxu0 %v542
        %667 = vmatprep.subr.mxu0 0.0
        %668 = vmatpush1.msra.mxu0 %v543
        %669 = vmatprep.subr.mxu0 0.0
        %670 = vmatpush1.msra.mxu0 %v544
        %671 = vmatprep.subr.mxu0 0.0
        %672 = vmatpush1.msra.mxu0 %v545
        %673 = vmatprep.subr.mxu0 0.0
        %674 = vmatpush1.msra.mxu0 %v546
        %675 = vmatprep.subr.mxu0 0.0
        %676 = vmatpush1.msra.mxu0 %v547
        %677 = vmatprep.subr.mxu0 0.0
        %678 = vmatpush1.msra.mxu0 %v548
        %679 = vmatprep.subr.mxu0 0.0
        %680 = vmatpush1.msra.mxu0 %v549
        %681 = vmatprep.subr.mxu0 0.0
        %682 = vmatpush1.msra.mxu0 %v550
        %683 = vmatprep.subr.mxu0 0.0
        %684 = vmatpush1.msra.mxu0 %v551
        %685 = vmatprep.subr.mxu0 0.0
        %686 = vmatpush1.msra.mxu0 %v552
        %687 = vmatprep.mubr.f32.mxu0 %v488
        %688 = vmatmul.mubr.f32.gmra.mrb[0].mxu0 %v487
        %v689 = vpop.f32.mrb[0].mxu0
        %v690 = vadd.f32 %v620, %v689
        %v691 = vpop.f32.mrb[0].mxu0
        %692 = vdwg.mxu0
        %v693 = vld [vmem:[%s390] sm:$0x1]
        %v694 = vld [vmem:[%s393] sm:$0x1]
        %v695 = vmul.f32 %v694, %v398
        %v696 = vadd.f32 %v693, %v695
        %v698 = vlaneseq
        %v699 = vshrl.u32 %v698, 7
        %v700 = vsub.s32 0, %v699
        %v701 = vrot.slane %v398, %v700
        %v703 = vmul.f32 %v690, %v701
        %704 = vmatprep.subr.mxu0 0.0
        %705 = vmatpush1.msra.mxu0 %v399
        %706 = vmatprep.subr.mxu0 0.0
        %707 = vmatpush1.msra.mxu0 %v400
        %708 = vmatprep.subr.mxu0 0.0
        %709 = vmatpush1.msra.mxu0 %v401
        %710 = vmatprep.subr.mxu0 0.0
        %711 = vmatpush1.msra.mxu0 %v402
        %712 = vmatprep.subr.mxu0 0.0
        %713 = vmatpush1.msra.mxu0 %v403
        %714 = vmatprep.subr.mxu0 0.0
        %715 = vmatpush1.msra.mxu0 %v404
        %716 = vmatprep.subr.mxu0 0.0
        %717 = vmatpush1.msra.mxu0 %v405
        %718 = vmatprep.subr.mxu0 0.0
        %719 = vmatpush1.msra.mxu0 %v406
        %720 = vmatprep.subr.mxu0 0.0
        %721 = vmatpush1.msra.mxu0 %v407
        %722 = vmatprep.subr.mxu0 0.0
        %723 = vmatpush1.msra.mxu0 %v408
        %724 = vmatprep.subr.mxu0 0.0
        %725 = vmatpush1.msra.mxu0 %v409
        %726 = vmatprep.subr.mxu0 0.0
        %727 = vmatpush1.msra.mxu0 %v410
        %728 = vmatprep.subr.mxu0 0.0
        %729 = vmatpush1.msra.mxu0 %v411
        %730 = vmatprep.subr.mxu0 0.0
        %731 = vmatpush1.msra.mxu0 %v412
        %732 = vmatprep.subr.mxu0 0.0
        %733 = vmatpush1.msra.mxu0 %v413
        %734 = vmatprep.subr.mxu0 0.0
        %735 = vmatpush1.msra.mxu0 %v414
        %736 = vmatprep.subr.mxu0 0.0
        %737 = vmatpush1.msra.mxu0 %v415
        %738 = vmatprep.subr.mxu0 0.0
        %739 = vmatpush1.msra.mxu0 %v416
        %740 = vmatprep.subr.mxu0 0.0
        %741 = vmatpush1.msra.mxu0 %v417
        %742 = vmatprep.subr.mxu0 0.0
        %743 = vmatpush1.msra.mxu0 %v418
        %744 = vmatprep.subr.mxu0 0.0
        %745 = vmatpush1.msra.mxu0 %v419
        %746 = vmatprep.subr.mxu0 0.0
        %747 = vmatpush1.msra.mxu0 %v420
        %748 = vmatprep.subr.mxu0 0.0
        %749 = vmatpush1.msra.mxu0 %v421
        %750 = vmatprep.subr.mxu0 0.0
        %751 = vmatpush1.msra.mxu0 %v422
        %752 = vmatprep.subr.mxu0 0.0
        %753 = vmatpush1.msra.mxu0 %v423
        %754 = vmatprep.subr.mxu0 0.0
        %755 = vmatpush1.msra.mxu0 %v424
        %756 = vmatprep.subr.mxu0 0.0
        %757 = vmatpush1.msra.mxu0 %v425
        %758 = vmatprep.subr.mxu0 0.0
        %759 = vmatpush1.msra.mxu0 %v426
        %760 = vmatprep.subr.mxu0 0.0
        %761 = vmatpush1.msra.mxu0 %v427
        %762 = vmatprep.subr.mxu0 0.0
        %763 = vmatpush1.msra.mxu0 %v428
        %764 = vmatprep.subr.mxu0 0.0
        %765 = vmatpush1.msra.mxu0 %v429
        %766 = vmatprep.subr.mxu0 0.0
        %767 = vmatpush1.msra.mxu0 %v430
        %768 = vmatprep.mubr.f32.mxu0 %v395
        %769 = vmatmul.mubr.f32.gmra.mrb[0].mxu0 %v394
        %v770 = vpop.f32.mrb[0].mxu0
        %v771 = vadd.f32 %v703, %v770
        %v772 = vpop.f32.mrb[0].mxu0
        %773 = vdwg.mxu0
        %774 = vmatprep.subr.mxu0 0.0
        %775 = vmatpush1.msra.mxu0 %v431
        %776 = vmatprep.subr.mxu0 0.0
        %777 = vmatpush1.msra.mxu0 %v432
        %778 = vmatprep.subr.mxu0 0.0
        %779 = vmatpush1.msra.mxu0 %v433
        %780 = vmatprep.subr.mxu0 0.0
        %781 = vmatpush1.msra.mxu0 %v434
        %782 = vmatprep.subr.mxu0 0.0
        %783 = vmatpush1.msra.mxu0 %v435
        %784 = vmatprep.subr.mxu0 0.0
        %785 = vmatpush1.msra.mxu0 %v436
        %786 = vmatprep.subr.mxu0 0.0
        %787 = vmatpush1.msra.mxu0 %v437
        %788 = vmatprep.subr.mxu0 0.0
        %789 = vmatpush1.msra.mxu0 %v438
        %790 = vmatprep.subr.mxu0 0.0
        %791 = vmatpush1.msra.mxu0 %v439
        %792 = vmatprep.subr.mxu0 0.0
        %793 = vmatpush1.msra.mxu0 %v440
        %794 = vmatprep.subr.mxu0 0.0
        %795 = vmatpush1.msra.mxu0 %v441
        %796 = vmatprep.subr.mxu0 0.0
        %797 = vmatpush1.msra.mxu0 %v442
        %798 = vmatprep.subr.mxu0 0.0
        %799 = vmatpush1.msra.mxu0 %v443
        %800 = vmatprep.subr.mxu0 0.0
        %801 = vmatpush1.msra.mxu0 %v444
        %802 = vmatprep.subr.mxu0 0.0
        %803 = vmatpush1.msra.mxu0 %v445
        %804 = vmatprep.subr.mxu0 0.0
        %805 = vmatpush1.msra.mxu0 %v446
        %806 = vmatprep.subr.mxu0 0.0
        %807 = vmatpush1.msra.mxu0 %v447
        %808 = vmatprep.subr.mxu0 0.0
        %809 = vmatpush1.msra.mxu0 %v448
        %810 = vmatprep.subr.mxu0 0.0
        %811 = vmatpush1.msra.mxu0 %v449
        %812 = vmatprep.subr.mxu0 0.0
        %813 = vmatpush1.msra.mxu0 %v450
        %814 = vmatprep.subr.mxu0 0.0
        %815 = vmatpush1.msra.mxu0 %v451
        %816 = vmatprep.subr.mxu0 0.0
        %817 = vmatpush1.msra.mxu0 %v452
        %818 = vmatprep.subr.mxu0 0.0
        %819 = vmatpush1.msra.mxu0 %v453
        %820 = vmatprep.subr.mxu0 0.0
        %821 = vmatpush1.msra.mxu0 %v454
        %822 = vmatprep.subr.mxu0 0.0
        %823 = vmatpush1.msra.mxu0 %v455
        %824 = vmatprep.subr.mxu0 0.0
        %825 = vmatpush1.msra.mxu0 %v456
        %826 = vmatprep.subr.mxu0 0.0
        %827 = vmatpush1.msra.mxu0 %v457
        %828 = vmatprep.subr.mxu0 0.0
        %829 = vmatpush1.msra.mxu0 %v458
        %830 = vmatprep.subr.mxu0 0.0
        %831 = vmatpush1.msra.mxu0 %v459
        %832 = vmatprep.subr.mxu0 0.0
        %833 = vmatpush1.msra.mxu0 %v460
        %834 = vmatprep.subr.mxu0 0.0
        %835 = vmatpush1.msra.mxu0 %v461
        %836 = vmatprep.subr.mxu0 0.0
        %837 = vmatpush1.msra.mxu0 %v462
        %838 = vmatprep.mubr.f32.mxu0 %v397
        %839 = vmatmul.mubr.f32.gmra.mrb[0].mxu0 %v396
        %v840 = vpop.f32.mrb[0].mxu0
        %v841 = vadd.f32 %v771, %v840
        %v842 = vpop.f32.mrb[0].mxu0
        %843 = vdwg.mxu0
        %v845 = vlaneseq
        %v846 = vshrl.u32 %v845, 7
        %v847 = vsub.s32 0, %v846
        %v848 = vrot.slane %v696, %v847
        %v850 = vadd.f32 %v841, %v848
        %851 = vst [vmem:[%s384] sm:$0xff] %v850
        %s852 = sand.u32 %s224, 1
        %s853 = scalar_lea.sflag [#allocation4], %s852
        %s854 = sand.u32 %s224, 1
        %s855 = smul.addr %s854, 8
        %s856 = scalar_lea.vmem [#allocation8], %s855
        // Predicated region
        $region61: #{tpu_custom_call.1} parent=47 // pred_check
          %p857 = pneg %p234
        $region62: #{tpu_custom_call.1} parent=47 // pred_check_branch
          %859 = sbr.rel (%p857) target = $region64
        $region63: #{tpu_custom_call.1} parent=47 // pred_region
          %s861 = ssub.s32 128, 128
          %862 = vsyncadd %s853, %s861
          %s863 = sadd.s32 %s29, %s30
          %s864 = smul.addr %s863, 128
          %s865 = scalar_lea.hbm %s7, %s864
          %s867 = sshll.u32 %s856, 4
          %s868 = int_to_ptr.vmem [resolvable:$true] %s867
          %870 = dma.vmem_to_hbm [thread:$0]  %s868, 128, %s865, %s853
        $region64: #{tpu_custom_call.1} parent=47 // pred_fallthru
          _
      $region48: #{tpu_custom_call.1} parent=5 // pred_fallthru
        _
      %p871 = scmp.le.s32.totalorder 2, %s20
      // Predicated region
      $region65: #{tpu_custom_call.1} parent=5 // pred_check
        %p872 = pneg %p871
      $region66: #{tpu_custom_call.1} parent=5 // pred_check_branch
        %874 = sbr.rel (%p872) target = $region68
      $region67: #{tpu_custom_call.1} parent=5 // pred_region
        %s875 = ssub.s32 %s20, 2
        // Predicated region
        $region69: #{tpu_custom_call.1} parent=67 // pred_check
          %p876 = pneg %p240
        $region70: #{tpu_custom_call.1} parent=67 // pred_check_branch
          %878 = sbr.rel (%p876) target = $region72
        $region71: #{tpu_custom_call.1} parent=67 // pred_region
          %s879 = sand.u32 %s225, 1
          %s880 = scalar_lea.sflag [#allocation4], %s879
          %s881 = sand.u32 %s225, 1
          %s882 = smul.addr %s881, 8
          %s883 = scalar_lea.vmem [#allocation8], %s882
          %884 = dma.done %s880, 128
        $region72: #{tpu_custom_call.1} parent=67 // pred_fallthru
          _
      $region68: #{tpu_custom_call.1} parent=5 // pred_fallthru
        _
    $region6: #{tpu_custom_call.1} parent=1 // loop_footer
      %s24 = sadd.s32 1, %s20
    $region7: #{tpu_custom_call.1} parent=1 // loop_footer_branch
      %19 = sbr.rel target = $region3
    $region8: #{tpu_custom_call.1} parent=1 // loop_exit
      _
    %885 = vsyncpa [#allocation3], 1
    %s886 = scalar_lea.sflag [#allocation3], 1
    %887 = vsyncpa %s886, 1
    %888 = vsyncpa [#allocation6], 1
    %889 = vsyncpa [#allocation4], 1
    %s890 = scalar_lea.sflag [#allocation4], 1
    %891 = vsyncpa %s890, 1

// kernel: tpu_custom_call.1
$region0: #{tpu_custom_call.1}
  #allocation0 [shape = 'u32[]', space=smem, size = 0x4, offset = 0x4, fixed_abs, tag = 'smem constant byte address 0x4 - core index']
  #allocation1 [shape = 'u32[144,128]{1,0:T(1,128)}', space=vmem, size = 0x12000, scoped, tag = 'internal scratch']
  %s0 = inlined_call_operand.hbm [shape: f32[16,512], index: 0, kind: input, shape index: {}]
  %s1 = inlined_call_operand.hbm [shape: f32[512,128], index: 1, kind: input, shape index: {}]
  %s2 = inlined_call_operand.hbm [shape: f32[512,128], index: 2, kind: input, shape index: {}]
  %s3 = inlined_call_operand.vmem [shape: f32[1,512], index: 3, kind: input, shape index: {}]
  %s4 = inlined_call_operand.vmem [shape: f32[1,128], index: 4, kind: input, shape index: {}]
  %s5 = inlined_call_operand.vmem [shape: f32[1,128], index: 5, kind: input, shape index: {}]
  %s6 = inlined_call_operand.vmem [shape: f32[1,128], index: 6, kind: input, shape index: {}]
  %s7 = inlined_call_operand.hbm [shape: f32[16,128], index: 7, kind: output, shape index: {}]
  %s8 = sld [smem:[#allocation0]]
  $region73: #{tpu_custom_call.1} parent=0
    _
  %s10 = ssub.s32 1, %s8
  %s11 = scalar_select 0, %s10, %s8
  $region1: #{tpu_custom_call.1} parent=0
    #allocation2 [shape = 'u8[32768]{0}', space=vmem, size = 0x8000, scoped, tag = 'input window, operand 0']
    #allocation3 [shape = 's32[2]{0}', space=sflag, size = 0x8, scoped, tag = 'scoped memory for tpu_custom_call.1']
    #allocation4 [shape = 's32[2]{0}', space=sflag, size = 0x8, scoped, tag = 'scoped memory for tpu_custom_call.1']
    #allocation5 [shape = 'u8[262144]{0}', space=vmem, size = 0x40000, scoped, tag = 'input window, operand 1, single buffered']
    #allocation6 [shape = 's32[1]{0}', space=sflag, size = 0x4, scoped, tag = 'scoped memory for tpu_custom_call.1']
    #allocation7 [shape = 'u8[262144]{0}', space=vmem, size = 0x40000, scoped, tag = 'input window, operand 2, single buffered']
    #allocation8 [shape = 'u8[8192]{0}', space=vmem, size = 0x2000, scoped, tag = 'output window, operand 0']
    %12 = vsyncpa [#allocation3], 0
    %s13 = scalar_lea.sflag [#allocation3], 1
    %14 = vsyncpa %s13, 0
    %15 = vsyncpa [#allocation6], 0
    %16 = vsyncpa [#allocation4], 0
    %s17 = scalar_lea.sflag [#allocation4], 1
    %18 = vsyncpa %s17, 0
    loop: start=0, step=1, limit=4
    $region2: #{tpu_custom_call.1} parent=1 // loop_pre_header
      _
    $region3: #{tpu_custom_call.1} parent=1 // loop_header
      %s20 = sphi 0, %s24
      %p21 = scmp.ge.s32.totalorder %s20, 4
      %s27 = sphi 0, %s39
      %s28 = sphi 0, %s35
      %s29 = sphi 0, %s27
      %s30 = sphi 0, %s28
      %s31 = sphi 0, %s29
      %s32 = sphi 0, %s30
      %s42 = sphi 0, %s44
      %s45 = sphi 0, %s42
      %s46 = sphi 0, %s45
      %s62 = sphi 0, %s46
      %s68 = sphi 0, %s70
      %s71 = sphi 0, %s68
      %s72 = sphi 0, %s71
      %s88 = sphi 0, %s72
      %s94 = sphi 0, %s96
      %s97 = sphi 0, %s94
      %s98 = sphi 0, %s97
      %s114 = sphi 0, %s98
      %s118 = sphi 0, %s118
      %s120 = sphi 0, %s118
      %s121 = sphi 0, %s120
      %s135 = sphi 0, %s121
      %s141 = sphi 0, %s143
      %s144 = sphi 0, %s141
      %s145 = sphi 0, %s144
      %s161 = sphi 0, %s145
      %s167 = sphi 0, %s169
      %s170 = sphi 0, %s167
      %s171 = sphi 0, %s170
      %s187 = sphi 0, %s171
      %s193 = sphi 0, %s195
      %s196 = sphi 0, %s193
      %s197 = sphi 0, %s196
      %s213 = sphi 0, %s197
      %s221 = sphi 0, %s223
      %s224 = sphi 0, %s221
      %s225 = sphi 0, %s224
      %s241 = sphi 0, %s225
    $region4: #{tpu_custom_call.1} parent=1 // loop_header_branch
      %23 = sbr.rel (%p21) target = $region8
    $region5: #{tpu_custom_call.1} parent=1 // loop_body
      %s25 = ssub.s32 %s20, 1
      %s26 = ssub.s32 %s20, 2
      %s33 = sadd.s32 1, %s28
      %p34 = scmp.ge.s32.totalorder %s33, 2
      %s35 = scalar_select %p34, 0, %s33
      %s36 = sadd.s32 1, %s27
      %s37 = scalar_select %p34, %s36, %s27
      %p38 = scmp.ge.s32.totalorder %s37, 1
      %s39 = scalar_select %p38, 0, %s37
      %s40 = ssub.s32 %s28, %s35
      %p41 = scmp.eq.s32.totalorder %s40, 0
      %s43 = sadd.s32 %s42, 1
      %s44 = scalar_select %p41, %s42, %s43
      %p47 = pneg %p41
      %p48 = scmp.eq.s32.totalorder %s20, 1
      %p49 = por %p47, %p48
      %p50 = scmp.ne.s32.totalorder %s42, %s45
      %p51 = scmp.eq.s32.totalorder %s20, 0
      %p52 = por %p50, %p51
      %p53 = scmp.ne.s32.totalorder %s42, %s45
      %p54 = scmp.eq.s32.totalorder %s25, 1
      %p55 = por %p53, %p54
      %p56 = scmp.ne.s32.totalorder %s45, %s46
      %p57 = scmp.eq.s32.totalorder %s25, 0
      %p58 = por %p56, %p57
      %p59 = scmp.ne.s32.totalorder %s45, %s46
      %p60 = scmp.eq.s32.totalorder %s26, 1
      %p61 = por %p59, %p60
      %p63 = scmp.ne.s32.totalorder %s46, %s62
      %p64 = scmp.eq.s32.totalorder %s26, 0
      %p65 = por %p63, %p64
      %s66 = ssub.s32 %s27, %s39
      %p67 = scmp.eq.s32.totalorder %s66, 0
      %s69 = sadd.s32 %s68, 1
      %s70 = scalar_select %p67, %s68, %s69
      %p73 = pneg %p67
      %p74 = scmp.eq.s32.totalorder %s20, 1
      %p75 = por %p73, %p74
      %p76 = scmp.ne.s32.totalorder %s68, %s71
      %p77 = scmp.eq.s32.totalorder %s20, 0
      %p78 = por %p76, %p77
      %p79 = scmp.ne.s32.totalorder %s68, %s71
      %p80 = scmp.eq.s32.totalorder %s25, 1
      %p81 = por %p79, %p80
      %p82 = scmp.ne.s32.totalorder %s71, %s72
      %p83 = scmp.eq.s32.totalorder %s25, 0
      %p84 = por %p82, %p83
      %p85 = scmp.ne.s32.totalorder %s71, %s72
      %p86 = scmp.eq.s32.totalorder %s26, 1
      %p87 = por %p85, %p86
      %p89 = scmp.ne.s32.totalorder %s72, %s88
      %p90 = scmp.eq.s32.totalorder %s26, 0
      %p91 = por %p89, %p90
      %s92 = ssub.s32 %s27, %s39
      %p93 = scmp.eq.s32.totalorder %s92, 0
      %s95 = sadd.s32 %s94, 1
      %s96 = scalar_select %p93, %s94, %s95
      %p99 = pneg %p93
      %p100 = scmp.eq.s32.totalorder %s20, 1
      %p101 = por %p99, %p100
      %p102 = scmp.ne.s32.totalorder %s94, %s97
      %p103 = scmp.eq.s32.totalorder %s20, 0
      %p104 = por %p102, %p103
      %p105 = scmp.ne.s32.totalorder %s94, %s97
      %p106 = scmp.eq.s32.totalorder %s25, 1
      %p107 = por %p105, %p106
      %p108 = scmp.ne.s32.totalorder %s97, %s98
      %p109 = scmp.eq.s32.totalorder %s25, 0
      %p110 = por %p108, %p109
      %p111 = scmp.ne.s32.totalorder %s97, %s98
      %p112 = scmp.eq.s32.totalorder %s26, 1
      %p113 = por %p111, %p112
      %p115 = scmp.ne.s32.totalorder %s98, %s114
      %p116 = scmp.eq.s32.totalorder %s26, 0
      %p117 = por %p115, %p116
      %s119 = sadd.s32 %s118, 1
      %p122 = scmp.eq.s32.totalorder %s20, 1
      %p123 = scmp.ne.s32.totalorder %s118, %s120
      %p124 = scmp.eq.s32.totalorder %s20, 0
      %p125 = por %p123, %p124
      %p126 = scmp.ne.s32.totalorder %s118, %s120
      %p127 = scmp.eq.s32.totalorder %s25, 1
      %p128 = por %p126, %p127
      %p129 = scmp.ne.s32.totalorder %s120, %s121
      %p130 = scmp.eq.s32.totalorder %s25, 0
      %p131 = por %p129, %p130
      %p132 = scmp.ne.s32.totalorder %s120, %s121
      %p133 = scmp.eq.s32.totalorder %s26, 1
      %p134 = por %p132, %p133
      %p136 = scmp.ne.s32.totalorder %s121, %s135
      %p137 = scmp.eq.s32.totalorder %s26, 0
      %p138 = por %p136, %p137
      %s139 = ssub.s32 %s27, %s39
      %p140 = scmp.eq.s32.totalorder %s139, 0
      %s142 = sadd.s32 %s141, 1
      %s143 = scalar_select %p140, %s141, %s142
      %p146 = pneg %p140
      %p147 = scmp.eq.s32.totalorder %s20, 1
      %p148 = por %p146, %p147
      %p149 = scmp.ne.s32.totalorder %s141, %s144
      %p150 = scmp.eq.s32.totalorder %s20, 0
      %p151 = por %p149, %p150
      %p152 = scmp.ne.s32.totalorder %s141, %s144
      %p153 = scmp.eq.s32.totalorder %s25, 1
      %p154 = por %p152, %p153
      %p155 = scmp.ne.s32.totalorder %s144, %s145
      %p156 = scmp.eq.s32.totalorder %s25, 0
      %p157 = por %p155, %p156
      %p158 = scmp.ne.s32.totalorder %s144, %s145
      %p159 = scmp.eq.s32.totalorder %s26, 1
      %p160 = por %p158, %p159
      %p162 = scmp.ne.s32.totalorder %s145, %s161
      %p163 = scmp.eq.s32.totalorder %s26, 0
      %p164 = por %p162, %p163
      %s165 = ssub.s32 %s27, %s39
      %p166 = scmp.eq.s32.totalorder %s165, 0
      %s168 = sadd.s32 %s167, 1
      %s169 = scalar_select %p166, %s167, %s168
      %p172 = pneg %p166
      %p173 = scmp.eq.s32.totalorder %s20, 1
      %p174 = por %p172, %p173
      %p175 = scmp.ne.s32.totalorder %s167, %s170
      %p176 = scmp.eq.s32.totalorder %s20, 0
      %p177 = por %p175, %p176
      %p178 = scmp.ne.s32.totalorder %s167, %s170
      %p179 = scmp.eq.s32.totalorder %s25, 1
      %p180 = por %p178, %p179
      %p181 = scmp.ne.s32.totalorder %s170, %s171
      %p182 = scmp.eq.s32.totalorder %s25, 0
      %p183 = por %p181, %p182
      %p184 = scmp.ne.s32.totalorder %s170, %s171
      %p185 = scmp.eq.s32.totalorder %s26, 1
      %p186 = por %p184, %p185
      %p188 = scmp.ne.s32.totalorder %s171, %s187
      %p189 = scmp.eq.s32.totalorder %s26, 0
      %p190 = por %p188, %p189
      %s191 = ssub.s32 %s27, %s39
      %p192 = scmp.eq.s32.totalorder %s191, 0
      %s194 = sadd.s32 %s193, 1
      %s195 = scalar_select %p192, %s193, %s194
      %p198 = pneg %p192
      %p199 = scmp.eq.s32.totalorder %s20, 1
      %p200 = por %p198, %p199
      %p201 = scmp.ne.s32.totalorder %s193, %s196
      %p202 = scmp.eq.s32.totalorder %s20, 0
      %p203 = por %p201, %p202
      %p204 = scmp.ne.s32.totalorder %s193, %s196
      %p205 = scmp.eq.s32.totalorder %s25, 1
      %p206 = por %p204, %p205
      %p207 = scmp.ne.s32.totalorder %s196, %s197
      %p208 = scmp.eq.s32.totalorder %s25, 0
      %p209 = por %p207, %p208
      %p210 = scmp.ne.s32.totalorder %s196, %s197
      %p211 = scmp.eq.s32.totalorder %s26, 1
      %p212 = por %p210, %p211
      %p214 = scmp.ne.s32.totalorder %s197, %s213
      %p215 = scmp.eq.s32.totalorder %s26, 0
      %p216 = por %p214, %p215
      %s217 = ssub.s32 %s28, %s35
      %s218 = ssub.s32 %s27, %s39
      %s219 = sor.u32 %s217, %s218
      %p220 = scmp.eq.s32.totalorder %s219, 0
      %s222 = sadd.s32 %s221, 1
      %s223 = scalar_select %p220, %s221, %s222
      %p226 = pneg %p220
      %p227 = scmp.eq.s32.totalorder %s20, 1
      %p228 = por %p226, %p227
      %p229 = scmp.ne.s32.totalorder %s221, %s224
      %p230 = scmp.eq.s32.totalorder %s20, 0
      %p231 = por %p229, %p230
      %p232 = scmp.ne.s32.totalorder %s221, %s224
      %p233 = scmp.eq.s32.totalorder %s25, 1
      %p234 = por %p232, %p233
      %p235 = scmp.ne.s32.totalorder %s224, %s225
      %p236 = scmp.eq.s32.totalorder %s25, 0
      %p237 = por %p235, %p236
      %p238 = scmp.ne.s32.totalorder %s224, %s225
      %p239 = scmp.eq.s32.totalorder %s26, 1
      %p240 = por %p238, %p239
      %p242 = scmp.ne.s32.totalorder %s225, %s241
      %p243 = scmp.eq.s32.totalorder %s26, 0
      %p244 = por %p242, %p243
      %p245 = scmp.le.s32.totalorder 1, %s20
      %p246 = scmp.lt.s32.totalorder %s20, 3
      %p247 = pnand %p245, %p246
      %p248 = pneg %p247
      // Predicated region
      $region9: #{tpu_custom_call.1} parent=5 // pred_check
        _
      $region10: #{tpu_custom_call.1} parent=5 // pred_check_branch
        %250 = sbr.rel (%p247) target = $region12
      $region11: #{tpu_custom_call.1} parent=5 // pred_region
        %s251 = ssub.s32 %s20, 1
        // Predicated region
        $region13: #{tpu_custom_call.1} parent=11 // pred_check
          %p252 = pneg %p84
        $region14: #{tpu_custom_call.1} parent=11 // pred_check_branch
          %254 = sbr.rel (%p252) target = $region16
        $region15: #{tpu_custom_call.1} parent=11 // pred_region
          %s256 = ssub.s32 8192, 8192
          %257 = vsyncadd [#allocation6], %s256
          %s258 = smul.addr %s29, 128
          %s259 = scalar_lea.hbm %s1, %s258
          %s260 = sshll.u32 [#allocation5], 4
          %s261 = int_to_ptr.vmem [resolvable:$true] %s260
          %266 = dma.hbm_to_vmem [thread:$0]  %s259, 8192, %s261, [#allocation6], 128, 128, 8
        $region16: #{tpu_custom_call.1} parent=11 // pred_fallthru
          _
        // Predicated region
        $region17: #{tpu_custom_call.1} parent=11 // pred_check
          %p267 = pneg %p110
        $region18: #{tpu_custom_call.1} parent=11 // pred_check_branch
          %269 = sbr.rel (%p267) target = $region20
        $region19: #{tpu_custom_call.1} parent=11 // pred_region
          %s271 = ssub.s32 8192, 8192
          %272 = vsyncadd [#allocation6], %s271
          %s273 = smul.addr %s29, 128
          %s274 = scalar_lea.hbm %s2, %s273
          %s275 = sshll.u32 [#allocation7], 4
          %s276 = int_to_ptr.vmem [resolvable:$true] %s275
          %281 = dma.hbm_to_vmem [thread:$0]  %s274, 8192, %s276, [#allocation6], 128, 128, 8
        $region20: #{tpu_custom_call.1} parent=11 // pred_fallthru
          _
        // Predicated region
        $region21: #{tpu_custom_call.1} parent=11 // pred_check
          %p282 = pneg %p131
        $region22: #{tpu_custom_call.1} parent=11 // pred_check_branch
          %284 = sbr.rel (%p282) target = $region24
        $region23: #{tpu_custom_call.1} parent=11 // pred_region
          _
        $region24: #{tpu_custom_call.1} parent=11 // pred_fallthru
          _
        // Predicated region
        $region25: #{tpu_custom_call.1} parent=11 // pred_check
          %p285 = pneg %p157
        $region26: #{tpu_custom_call.1} parent=11 // pred_check_branch
          %287 = sbr.rel (%p285) target = $region28
        $region27: #{tpu_custom_call.1} parent=11 // pred_region
          %p288 = scmp.lt.s32.totalorder %s29, 0
          %s289 = scalar_select %p288, %s29, 0
          %s290 = scalar_lea.vmem %s4, %s289
        $region28: #{tpu_custom_call.1} parent=11 // pred_fallthru
          _
        // Predicated region
        $region29: #{tpu_custom_call.1} parent=11 // pred_check
          %p291 = pneg %p183
        $region30: #{tpu_custom_call.1} parent=11 // pred_check_branch
          %293 = sbr.rel (%p291) target = $region32
        $region31: #{tpu_custom_call.1} parent=11 // pred_region
          %p294 = scmp.lt.s32.totalorder %s29, 0
          %s295 = scalar_select %p294, %s29, 0
          %s296 = scalar_lea.vmem %s5, %s295
        $region32: #{tpu_custom_call.1} parent=11 // pred_fallthru
          _
        // Predicated region
        $region33: #{tpu_custom_call.1} parent=11 // pred_check
          %p297 = pneg %p209
        $region34: #{tpu_custom_call.1} parent=11 // pred_check_branch
          %299 = sbr.rel (%p297) target = $region36
        $region35: #{tpu_custom_call.1} parent=11 // pred_region
          %p300 = scmp.lt.s32.totalorder %s29, 0
          %s301 = scalar_select %p300, %s29, 0
          %s302 = scalar_lea.vmem %s6, %s301
        $region36: #{tpu_custom_call.1} parent=11 // pred_fallthru
          _
      $region12: #{tpu_custom_call.1} parent=5 // pred_fallthru
        _
      %p303 = scmp.lt.s32.totalorder %s20, 2
      // Predicated region
      $region37: #{tpu_custom_call.1} parent=5 // pred_check
        %p304 = pneg %p303
      $region38: #{tpu_custom_call.1} parent=5 // pred_check_branch
        %306 = sbr.rel (%p304) target = $region40
      $region39: #{tpu_custom_call.1} parent=5 // pred_region
        // Predicated region
        $region41: #{tpu_custom_call.1} parent=39 // pred_check
          %p307 = pneg %p52
        $region42: #{tpu_custom_call.1} parent=39 // pred_check_branch
          %309 = sbr.rel (%p307) target = $region44
        $region43: #{tpu_custom_call.1} parent=39 // pred_region
          %s310 = sand.u32 %s42, 1
          %s311 = scalar_lea.sflag [#allocation3], %s310
          %s312 = sand.u32 %s42, 1
          %s313 = smul.addr %s312, 32
          %s314 = scalar_lea.vmem [#allocation2], %s313
          %s316 = ssub.s32 512, 512
          %317 = vsyncadd %s311, %s316
          %s318 = smul.addr %s28, 4
          %s319 = smul.addr %s318, 128
          %s320 = scalar_lea.hbm %s0, %s319
          %s322 = sshll.u32 %s314, 4
          %s323 = int_to_ptr.vmem [resolvable:$true] %s322
          %325 = dma.hbm_to_vmem [thread:$0]  %s320, 512, %s323, %s311
        $region44: #{tpu_custom_call.1} parent=39 // pred_fallthru
          _
      $region40: #{tpu_custom_call.1} parent=5 // pred_fallthru
        _
      %p326 = scmp.le.s32.totalorder 1, %s20
      %p327 = scmp.lt.s32.totalorder %s20, 3
      %p328 = pnand %p326, %p327
      %p329 = pneg %p328
      // Predicated region
      $region45: #{tpu_custom_call.1} parent=5 // pred_check
        _
      $region46: #{tpu_custom_call.1} parent=5 // pred_check_branch
        %331 = sbr.rel (%p328) target = $region48
      $region47: #{tpu_custom_call.1} parent=5 // pred_region
        %s332 = ssub.s32 %s20, 1
        %s333 = sand.u32 %s45, 1
        %s334 = scalar_lea.sflag [#allocation3], %s333
        %s335 = sand.u32 %s45, 1
        %s336 = smul.addr %s335, 32
        %s337 = scalar_lea.vmem [#allocation2], %s336
        // Predicated region
        $region49: #{tpu_custom_call.1} parent=47 // pred_check
          %p338 = pneg %p58
        $region50: #{tpu_custom_call.1} parent=47 // pred_check_branch
          %340 = sbr.rel (%p338) target = $region52
        $region51: #{tpu_custom_call.1} parent=47 // pred_region
          %341 = dma.done %s334, 512
        $region52: #{tpu_custom_call.1} parent=47 // pred_fallthru
          _
        // Predicated region
        $region53: #{tpu_custom_call.1} parent=47 // pred_check
          %p342 = pneg %p84
        $region54: #{tpu_custom_call.1} parent=47 // pred_check_branch
          %344 = sbr.rel (%p342) target = $region56
        $region55: #{tpu_custom_call.1} parent=47 // pred_region
          %345 = dma.done [#allocation6], 8192
        $region56: #{tpu_custom_call.1} parent=47 // pred_fallthru
          _
        // Predicated region
        $region57: #{tpu_custom_call.1} parent=47 // pred_check
          %p346 = pneg %p110
        $region58: #{tpu_custom_call.1} parent=47 // pred_check_branch
          %348 = sbr.rel (%p346) target = $region60
        $region59: #{tpu_custom_call.1} parent=47 // pred_region
          %349 = dma.done [#allocation6], 8192
        $region60: #{tpu_custom_call.1} parent=47 // pred_fallthru
          _
        %s350 = sand.u32 %s45, 1
        %s351 = scalar_lea.sflag [#allocation3], %s350
        %s352 = sand.u32 %s45, 1
        %s353 = smul.addr %s352, 32
        %s354 = scalar_lea.vmem [#allocation2], %s353
        %p355 = pneg %p58
        %p356 = pneg %p55
        %p357 = pneg %p84
        %p358 = pneg %p81
        %p359 = pneg %p110
        %p360 = pneg %p107
        %p361 = pneg %p131
        %p362 = pneg %p128
        %p363 = scmp.lt.s32.totalorder %s29, 0
        %s364 = scalar_select %p363, %s29, 0
        %s365 = scalar_lea.vmem %s4, %s364
        %p366 = pneg %p157
        %p367 = pneg %p154
        %p368 = scmp.lt.s32.totalorder %s29, 0
        %s369 = scalar_select %p368, %s29, 0
        %s370 = scalar_lea.vmem %s5, %s369
        %p371 = pneg %p183
        %p372 = pneg %p180
        %p373 = scmp.lt.s32.totalorder %s29, 0
        %s374 = scalar_select %p373, %s29, 0
        %s375 = scalar_lea.vmem %s6, %s374
        %p376 = pneg %p209
        %p377 = pneg %p206
        %p378 = pneg %p237
        %p379 = pneg %p234
        %s380 = sand.u32 %s224, 1
        %s381 = scalar_lea.sflag [#allocation4], %s380
        %s382 = sand.u32 %s224, 1
        %s383 = smul.addr %s382, 8
        %s384 = scalar_lea.vmem [#allocation8], %s383
        %p385 = scmp.lt.s32.totalorder %s29, 0
        %s386 = scalar_select %p385, %s29, 0
        %s387 = scalar_lea.vmem %s4, %s386
        %p388 = scmp.lt.s32.totalorder %s29, 0
        %s389 = scalar_select %p388, %s29, 0
        %s390 = scalar_lea.vmem %s5, %s389
        %p391 = scmp.lt.s32.totalorder %s29, 0
        %s392 = scalar_select %p391, %s29, 0
        %s393 = scalar_lea.vmem %s6, %s392
        %v394 = vld [vmem:[%s337] sm:$0xff]
        %v395 = vld [vmem:[%s337 + $0x8] sm:$0xff]
        %v396 = vld [vmem:[%s337 + $0x10] sm:$0xff]
        %v397 = vld [vmem:[%s337 + $0x18] sm:$0xff]
        %v398 = vld [vmem:[%s387] sm:$0x1]
        %v399 = vld [vmem:[#allocation5] sm:$0xff]
        %v400 = vld [vmem:[#allocation5 + $0x8] sm:$0xff]
        %v401 = vld [vmem:[#allocation5 + $0x10] sm:$0xff]
        %v402 = vld [vmem:[#allocation5 + $0x18] sm:$0xff]
        %v403 = vld [vmem:[#allocation5 + $0x20] sm:$0xff]
        %v404 = vld [vmem:[#allocation5 + $0x28] sm:$0xff]
        %v405 = vld [vmem:[#allocation5 + $0x30] sm:$0xff]
        %v406 = vld [vmem:[#allocation5 + $0x38] sm:$0xff]
        %v407 = vld [vmem:[#allocation5 + $0x40] sm:$0xff]
        %v408 = vld [vmem:[#allocation5 + $0x48] sm:$0xff]
        %v409 = vld [vmem:[#allocation5 + $0x50] sm:$0xff]
        %v410 = vld [vmem:[#allocation5 + $0x58] sm:$0xff]
        %v411 = vld [vmem:[#allocation5 + $0x60] sm:$0xff]
        %v412 = vld [vmem:[#allocation5 + $0x68] sm:$0xff]
        %v413 = vld [vmem:[#allocation5 + $0x70] sm:$0xff]
        %v414 = vld [vmem:[#allocation5 + $0x78] sm:$0xff]
        %v415 = vld [vmem:[#allocation5 + $0x80] sm:$0xff]
        %v416 = vld [vmem:[#allocation5 + $0x88] sm:$0xff]
        %v417 = vld [vmem:[#allocation5 + $0x90] sm:$0xff]
        %v418 = vld [vmem:[#allocation5 + $0x98] sm:$0xff]
        %v419 = vld [vmem:[#allocation5 + $0xa0] sm:$0xff]
        %v420 = vld [vmem:[#allocation5 + $0xa8] sm:$0xff]
        %v421 = vld [vmem:[#allocation5 + $0xb0] sm:$0xff]
        %v422 = vld [vmem:[#allocation5 + $0xb8] sm:$0xff]
        %v423 = vld [vmem:[#allocation5 + $0xc0] sm:$0xff]
        %v424 = vld [vmem:[#allocation5 + $0xc8] sm:$0xff]
        %v425 = vld [vmem:[#allocation5 + $0xd0] sm:$0xff]
        %v426 = vld [vmem:[#allocation5 + $0xd8] sm:$0xff]
        %v427 = vld [vmem:[#allocation5 + $0xe0] sm:$0xff]
        %v428 = vld [vmem:[#allocation5 + $0xe8] sm:$0xff]
        %v429 = vld [vmem:[#allocation5 + $0xf0] sm:$0xff]
        %v430 = vld [vmem:[#allocation5 + $0xf8] sm:$0xff]
        %v431 = vld [vmem:[#allocation5 + $0x100] sm:$0xff]
        %v432 = vld [vmem:[#allocation5 + $0x108] sm:$0xff]
        %v433 = vld [vmem:[#allocation5 + $0x110] sm:$0xff]
        %v434 = vld [vmem:[#allocation5 + $0x118] sm:$0xff]
        %v435 = vld [vmem:[#allocation5 + $0x120] sm:$0xff]
        %v436 = vld [vmem:[#allocation5 + $0x128] sm:$0xff]
        %v437 = vld [vmem:[#allocation5 + $0x130] sm:$0xff]
        %v438 = vld [vmem:[#allocation5 + $0x138] sm:$0xff]
        %v439 = vld [vmem:[#allocation5 + $0x140] sm:$0xff]
        %v440 = vld [vmem:[#allocation5 + $0x148] sm:$0xff]
        %v441 = vld [vmem:[#allocation5 + $0x150] sm:$0xff]
        %v442 = vld [vmem:[#allocation5 + $0x158] sm:$0xff]
        %v443 = vld [vmem:[#allocation5 + $0x160] sm:$0xff]
        %v444 = vld [vmem:[#allocation5 + $0x168] sm:$0xff]
        %v445 = vld [vmem:[#allocation5 + $0x170] sm:$0xff]
        %v446 = vld [vmem:[#allocation5 + $0x178] sm:$0xff]
        %v447 = vld [vmem:[#allocation5 + $0x180] sm:$0xff]
        %v448 = vld [vmem:[#allocation5 + $0x188] sm:$0xff]
        %v449 = vld [vmem:[#allocation5 + $0x190] sm:$0xff]
        %v450 = vld [vmem:[#allocation5 + $0x198] sm:$0xff]
        %v451 = vld [vmem:[#allocation5 + $0x1a0] sm:$0xff]
        %v452 = vld [vmem:[#allocation5 + $0x1a8] sm:$0xff]
        %v453 = vld [vmem:[#allocation5 + $0x1b0] sm:$0xff]
        %v454 = vld [vmem:[#allocation5 + $0x1b8] sm:$0xff]
        %v455 = vld [vmem:[#allocation5 + $0x1c0] sm:$0xff]
        %v456 = vld [vmem:[#allocation5 + $0x1c8] sm:$0xff]
        %v457 = vld [vmem:[#allocation5 + $0x1d0] sm:$0xff]
        %v458 = vld [vmem:[#allocation5 + $0x1d8] sm:$0xff]
        %v459 = vld [vmem:[#allocation5 + $0x1e0] sm:$0xff]
        %v460 = vld [vmem:[#allocation5 + $0x1e8] sm:$0xff]
        %v461 = vld [vmem:[#allocation5 + $0x1f0] sm:$0xff]
        %v462 = vld [vmem:[#allocation5 + $0x1f8] sm:$0xff]
        %v463 = vld [vmem:[%s3] sm:$0xf]
        %v465 = vlaneseq
        %v466 = vshrl.u32 %v465, 7
        %v467 = vsub.s32 0, %v466
        %v468 = vrot.slane %v463, %v467
        %v469 = vlaneseq
        %v470 = vshrl.u32 %v469, 7
        %v471 = vsub.s32 1, %v470
        %v472 = vrot.slane %v463, %v471
        %v473 = vlaneseq
        %v474 = vshrl.u32 %v473, 7
        %v475 = vsub.s32 2, %v474
        %v476 = vrot.slane %v463, %v475
        %v477 = vlaneseq
        %v478 = vshrl.u32 %v477, 7
        %v479 = vsub.s32 3, %v478
        %v480 = vrot.slane %v463, %v479
        %v485 = vmul.f32 %v394, %v468
        %v486 = vmul.f32 %v395, %v472
        %v487 = vmul.f32 %v396, %v476
        %v488 = vmul.f32 %v397, %v480
        %v489 = vld [vmem:[#allocation7] sm:$0xff]
        %v490 = vld [vmem:[#allocation7 + $0x8] sm:$0xff]
        %v491 = vld [vmem:[#allocation7 + $0x10] sm:$0xff]
        %v492 = vld [vmem:[#allocation7 + $0x18] sm:$0xff]
        %v493 = vld [vmem:[#allocation7 + $0x20] sm:$0xff]
        %v494 = vld [vmem:[#allocation7 + $0x28] sm:$0xff]
        %v495 = vld [vmem:[#allocation7 + $0x30] sm:$0xff]
        %v496 = vld [vmem:[#allocation7 + $0x38] sm:$0xff]
        %v497 = vld [vmem:[#allocation7 + $0x40] sm:$0xff]
        %v498 = vld [vmem:[#allocation7 + $0x48] sm:$0xff]
        %v499 = vld [vmem:[#allocation7 + $0x50] sm:$0xff]
        %v500 = vld [vmem:[#allocation7 + $0x58] sm:$0xff]
        %v501 = vld [vmem:[#allocation7 + $0x60] sm:$0xff]
        %v502 = vld [vmem:[#allocation7 + $0x68] sm:$0xff]
        %v503 = vld [vmem:[#allocation7 + $0x70] sm:$0xff]
        %v504 = vld [vmem:[#allocation7 + $0x78] sm:$0xff]
        %v505 = vld [vmem:[#allocation7 + $0x80] sm:$0xff]
        %v506 = vld [vmem:[#allocation7 + $0x88] sm:$0xff]
        %v507 = vld [vmem:[#allocation7 + $0x90] sm:$0xff]
        %v508 = vld [vmem:[#allocation7 + $0x98] sm:$0xff]
        %v509 = vld [vmem:[#allocation7 + $0xa0] sm:$0xff]
        %v510 = vld [vmem:[#allocation7 + $0xa8] sm:$0xff]
        %v511 = vld [vmem:[#allocation7 + $0xb0] sm:$0xff]
        %v512 = vld [vmem:[#allocation7 + $0xb8] sm:$0xff]
        %v513 = vld [vmem:[#allocation7 + $0xc0] sm:$0xff]
        %v514 = vld [vmem:[#allocation7 + $0xc8] sm:$0xff]
        %v515 = vld [vmem:[#allocation7 + $0xd0] sm:$0xff]
        %v516 = vld [vmem:[#allocation7 + $0xd8] sm:$0xff]
        %v517 = vld [vmem:[#allocation7 + $0xe0] sm:$0xff]
        %v518 = vld [vmem:[#allocation7 + $0xe8] sm:$0xff]
        %v519 = vld [vmem:[#allocation7 + $0xf0] sm:$0xff]
        %v520 = vld [vmem:[#allocation7 + $0xf8] sm:$0xff]
        %v521 = vld [vmem:[#allocation7 + $0x100] sm:$0xff]
        %v522 = vld [vmem:[#allocation7 + $0x108] sm:$0xff]
        %v523 = vld [vmem:[#allocation7 + $0x110] sm:$0xff]
        %v524 = vld [vmem:[#allocation7 + $0x118] sm:$0xff]
        %v525 = vld [vmem:[#allocation7 + $0x120] sm:$0xff]
        %v526 = vld [vmem:[#allocation7 + $0x128] sm:$0xff]
        %v527 = vld [vmem:[#allocation7 + $0x130] sm:$0xff]
        %v528 = vld [vmem:[#allocation7 + $0x138] sm:$0xff]
        %v529 = vld [vmem:[#allocation7 + $0x140] sm:$0xff]
        %v530 = vld [vmem:[#allocation7 + $0x148] sm:$0xff]
        %v531 = vld [vmem:[#allocation7 + $0x150] sm:$0xff]
        %v532 = vld [vmem:[#allocation7 + $0x158] sm:$0xff]
        %v533 = vld [vmem:[#allocation7 + $0x160] sm:$0xff]
        %v534 = vld [vmem:[#allocation7 + $0x168] sm:$0xff]
        %v535 = vld [vmem:[#allocation7 + $0x170] sm:$0xff]
        %v536 = vld [vmem:[#allocation7 + $0x178] sm:$0xff]
        %v537 = vld [vmem:[#allocation7 + $0x180] sm:$0xff]
        %v538 = vld [vmem:[#allocation7 + $0x188] sm:$0xff]
        %v539 = vld [vmem:[#allocation7 + $0x190] sm:$0xff]
        %v540 = vld [vmem:[#allocation7 + $0x198] sm:$0xff]
        %v541 = vld [vmem:[#allocation7 + $0x1a0] sm:$0xff]
        %v542 = vld [vmem:[#allocation7 + $0x1a8] sm:$0xff]
        %v543 = vld [vmem:[#allocation7 + $0x1b0] sm:$0xff]
        %v544 = vld [vmem:[#allocation7 + $0x1b8] sm:$0xff]
        %v545 = vld [vmem:[#allocation7 + $0x1c0] sm:$0xff]
        %v546 = vld [vmem:[#allocation7 + $0x1c8] sm:$0xff]
        %v547 = vld [vmem:[#allocation7 + $0x1d0] sm:$0xff]
        %v548 = vld [vmem:[#allocation7 + $0x1d8] sm:$0xff]
        %v549 = vld [vmem:[#allocation7 + $0x1e0] sm:$0xff]
        %v550 = vld [vmem:[#allocation7 + $0x1e8] sm:$0xff]
        %v551 = vld [vmem:[#allocation7 + $0x1f0] sm:$0xff]
        %v552 = vld [vmem:[#allocation7 + $0x1f8] sm:$0xff]
        %553 = vmatprep.subr.mxu0 0.0
        %554 = vmatpush1.msra.mxu0 %v489
        %555 = vmatprep.subr.mxu0 0.0
        %556 = vmatpush1.msra.mxu0 %v490
        %557 = vmatprep.subr.mxu0 0.0
        %558 = vmatpush1.msra.mxu0 %v491
        %559 = vmatprep.subr.mxu0 0.0
        %560 = vmatpush1.msra.mxu0 %v492
        %561 = vmatprep.subr.mxu0 0.0
        %562 = vmatpush1.msra.mxu0 %v493
        %563 = vmatprep.subr.mxu0 0.0
        %564 = vmatpush1.msra.mxu0 %v494
        %565 = vmatprep.subr.mxu0 0.0
        %566 = vmatpush1.msra.mxu0 %v495
        %567 = vmatprep.subr.mxu0 0.0
        %568 = vmatpush1.msra.mxu0 %v496
        %569 = vmatprep.subr.mxu0 0.0
        %570 = vmatpush1.msra.mxu0 %v497
        %571 = vmatprep.subr.mxu0 0.0
        %572 = vmatpush1.msra.mxu0 %v498
        %573 = vmatprep.subr.mxu0 0.0
        %574 = vmatpush1.msra.mxu0 %v499
        %575 = vmatprep.subr.mxu0 0.0
        %576 = vmatpush1.msra.mxu0 %v500
        %577 = vmatprep.subr.mxu0 0.0
        %578 = vmatpush1.msra.mxu0 %v501
        %579 = vmatprep.subr.mxu0 0.0
        %580 = vmatpush1.msra.mxu0 %v502
        %581 = vmatprep.subr.mxu0 0.0
        %582 = vmatpush1.msra.mxu0 %v503
        %583 = vmatprep.subr.mxu0 0.0
        %584 = vmatpush1.msra.mxu0 %v504
        %585 = vmatprep.subr.mxu0 0.0
        %586 = vmatpush1.msra.mxu0 %v505
        %587 = vmatprep.subr.mxu0 0.0
        %588 = vmatpush1.msra.mxu0 %v506
        %589 = vmatprep.subr.mxu0 0.0
        %590 = vmatpush1.msra.mxu0 %v507
        %591 = vmatprep.subr.mxu0 0.0
        %592 = vmatpush1.msra.mxu0 %v508
        %593 = vmatprep.subr.mxu0 0.0
        %594 = vmatpush1.msra.mxu0 %v509
        %595 = vmatprep.subr.mxu0 0.0
        %596 = vmatpush1.msra.mxu0 %v510
        %597 = vmatprep.subr.mxu0 0.0
        %598 = vmatpush1.msra.mxu0 %v511
        %599 = vmatprep.subr.mxu0 0.0
        %600 = vmatpush1.msra.mxu0 %v512
        %601 = vmatprep.subr.mxu0 0.0
        %602 = vmatpush1.msra.mxu0 %v513
        %603 = vmatprep.subr.mxu0 0.0
        %604 = vmatpush1.msra.mxu0 %v514
        %605 = vmatprep.subr.mxu0 0.0
        %606 = vmatpush1.msra.mxu0 %v515
        %607 = vmatprep.subr.mxu0 0.0
        %608 = vmatpush1.msra.mxu0 %v516
        %609 = vmatprep.subr.mxu0 0.0
        %610 = vmatpush1.msra.mxu0 %v517
        %611 = vmatprep.subr.mxu0 0.0
        %612 = vmatpush1.msra.mxu0 %v518
        %613 = vmatprep.subr.mxu0 0.0
        %614 = vmatpush1.msra.mxu0 %v519
        %615 = vmatprep.subr.mxu0 0.0
        %616 = vmatpush1.msra.mxu0 %v520
        %617 = vmatprep.mubr.f32.mxu0 %v486
        %618 = vmatmul.mubr.f32.gmra.mrb[0].mxu0 %v485
        %v619 = vpop.f32.mrb[0].mxu0
        %v620 = vadd.f32 0.0, %v619
        %v621 = vpop.f32.mrb[0].mxu0
        %622 = vdwg.mxu0
        %623 = vmatprep.subr.mxu0 0.0
        %624 = vmatpush1.msra.mxu0 %v521
        %625 = vmatprep.subr.mxu0 0.0
        %626 = vmatpush1.msra.mxu0 %v522
        %627 = vmatprep.subr.mxu0 0.0
        %628 = vmatpush1.msra.mxu0 %v523
        %629 = vmatprep.subr.mxu0 0.0
        %630 = vmatpush1.msra.mxu0 %v524
        %631 = vmatprep.subr.mxu0 0.0
        %632 = vmatpush1.msra.mxu0 %v525
        %633 = vmatprep.subr.mxu0 0.0
        %634 = vmatpush1.msra.mxu0 %v526
        %635 = vmatprep.subr.mxu0 0.0
        %636 = vmatpush1.msra.mxu0 %v527
        %637 = vmatprep.subr.mxu0 0.0
        %638 = vmatpush1.msra.mxu0 %v528
        %639 = vmatprep.subr.mxu0 0.0
        %640 = vmatpush1.msra.mxu0 %v529
        %641 = vmatprep.subr.mxu0 0.0
        %642 = vmatpush1.msra.mxu0 %v530
        %643 = vmatprep.subr.mxu0 0.0
        %644 = vmatpush1.msra.mxu0 %v531
        %645 = vmatprep.subr.mxu0 0.0
        %646 = vmatpush1.msra.mxu0 %v532
        %647 = vmatprep.subr.mxu0 0.0
        %648 = vmatpush1.msra.mxu0 %v533
        %649 = vmatprep.subr.mxu0 0.0
        %650 = vmatpush1.msra.mxu0 %v534
        %651 = vmatprep.subr.mxu0 0.0
        %652 = vmatpush1.msra.mxu0 %v535
        %653 = vmatprep.subr.mxu0 0.0
        %654 = vmatpush1.msra.mxu0 %v536
        %655 = vmatprep.subr.mxu0 0.0
        %656 = vmatpush1.msra.mxu0 %v537
        %657 = vmatprep.subr.mxu0 0.0
        %658 = vmatpush1.msra.mxu0 %v538
        %659 = vmatprep.subr.mxu0 0.0
        %660 = vmatpush1.msra.mxu0 %v539
        %661 = vmatprep.subr.mxu0 0.0
        %662 = vmatpush1.msra.mxu0 %v540
        %663 = vmatprep.subr.mxu0 0.0
        %664 = vmatpush1.msra.mxu0 %v541
        %665 = vmatprep.subr.mxu0 0.0
        %666 = vmatpush1.msra.mxu0 %v542
        %667 = vmatprep.subr.mxu0 0.0
        %668 = vmatpush1.msra.mxu0 %v543
        %669 = vmatprep.subr.mxu0 0.0
        %670 = vmatpush1.msra.mxu0 %v544
        %671 = vmatprep.subr.mxu0 0.0
        %672 = vmatpush1.msra.mxu0 %v545
        %673 = vmatprep.subr.mxu0 0.0
        %674 = vmatpush1.msra.mxu0 %v546
        %675 = vmatprep.subr.mxu0 0.0
        %676 = vmatpush1.msra.mxu0 %v547
        %677 = vmatprep.subr.mxu0 0.0
        %678 = vmatpush1.msra.mxu0 %v548
        %679 = vmatprep.subr.mxu0 0.0
        %680 = vmatpush1.msra.mxu0 %v549
        %681 = vmatprep.subr.mxu0 0.0
        %682 = vmatpush1.msra.mxu0 %v550
        %683 = vmatprep.subr.mxu0 0.0
        %684 = vmatpush1.msra.mxu0 %v551
        %685 = vmatprep.subr.mxu0 0.0
        %686 = vmatpush1.msra.mxu0 %v552
        %687 = vmatprep.mubr.f32.mxu0 %v488
        %688 = vmatmul.mubr.f32.gmra.mrb[0].mxu0 %v487
        %v689 = vpop.f32.mrb[0].mxu0
        %v690 = vadd.f32 %v620, %v689
        %v691 = vpop.f32.mrb[0].mxu0
        %692 = vdwg.mxu0
        %v693 = vld [vmem:[%s390] sm:$0x1]
        %v694 = vld [vmem:[%s393] sm:$0x1]
        %v695 = vmul.f32 %v694, %v398
        %v696 = vadd.f32 %v693, %v695
        %v698 = vlaneseq
        %v699 = vshrl.u32 %v698, 7
        %v700 = vsub.s32 0, %v699
        %v701 = vrot.slane %v398, %v700
        %v703 = vmul.f32 %v690, %v701
        %704 = vmatprep.subr.mxu0 0.0
        %705 = vmatpush1.msra.mxu0 %v399
        %706 = vmatprep.subr.mxu0 0.0
        %707 = vmatpush1.msra.mxu0 %v400
        %708 = vmatprep.subr.mxu0 0.0
        %709 = vmatpush1.msra.mxu0 %v401
        %710 = vmatprep.subr.mxu0 0.0
        %711 = vmatpush1.msra.mxu0 %v402
        %712 = vmatprep.subr.mxu0 0.0
        %713 = vmatpush1.msra.mxu0 %v403
        %714 = vmatprep.subr.mxu0 0.0
        %715 = vmatpush1.msra.mxu0 %v404
        %716 = vmatprep.subr.mxu0 0.0
        %717 = vmatpush1.msra.mxu0 %v405
        %718 = vmatprep.subr.mxu0 0.0
        %719 = vmatpush1.msra.mxu0 %v406
        %720 = vmatprep.subr.mxu0 0.0
        %721 = vmatpush1.msra.mxu0 %v407
        %722 = vmatprep.subr.mxu0 0.0
        %723 = vmatpush1.msra.mxu0 %v408
        %724 = vmatprep.subr.mxu0 0.0
        %725 = vmatpush1.msra.mxu0 %v409
        %726 = vmatprep.subr.mxu0 0.0
        %727 = vmatpush1.msra.mxu0 %v410
        %728 = vmatprep.subr.mxu0 0.0
        %729 = vmatpush1.msra.mxu0 %v411
        %730 = vmatprep.subr.mxu0 0.0
        %731 = vmatpush1.msra.mxu0 %v412
        %732 = vmatprep.subr.mxu0 0.0
        %733 = vmatpush1.msra.mxu0 %v413
        %734 = vmatprep.subr.mxu0 0.0
        %735 = vmatpush1.msra.mxu0 %v414
        %736 = vmatprep.subr.mxu0 0.0
        %737 = vmatpush1.msra.mxu0 %v415
        %738 = vmatprep.subr.mxu0 0.0
        %739 = vmatpush1.msra.mxu0 %v416
        %740 = vmatprep.subr.mxu0 0.0
        %741 = vmatpush1.msra.mxu0 %v417
        %742 = vmatprep.subr.mxu0 0.0
        %743 = vmatpush1.msra.mxu0 %v418
        %744 = vmatprep.subr.mxu0 0.0
        %745 = vmatpush1.msra.mxu0 %v419
        %746 = vmatprep.subr.mxu0 0.0
        %747 = vmatpush1.msra.mxu0 %v420
        %748 = vmatprep.subr.mxu0 0.0
        %749 = vmatpush1.msra.mxu0 %v421
        %750 = vmatprep.subr.mxu0 0.0
        %751 = vmatpush1.msra.mxu0 %v422
        %752 = vmatprep.subr.mxu0 0.0
        %753 = vmatpush1.msra.mxu0 %v423
        %754 = vmatprep.subr.mxu0 0.0
        %755 = vmatpush1.msra.mxu0 %v424
        %756 = vmatprep.subr.mxu0 0.0
        %757 = vmatpush1.msra.mxu0 %v425
        %758 = vmatprep.subr.mxu0 0.0
        %759 = vmatpush1.msra.mxu0 %v426
        %760 = vmatprep.subr.mxu0 0.0
        %761 = vmatpush1.msra.mxu0 %v427
        %762 = vmatprep.subr.mxu0 0.0
        %763 = vmatpush1.msra.mxu0 %v428
        %764 = vmatprep.subr.mxu0 0.0
        %765 = vmatpush1.msra.mxu0 %v429
        %766 = vmatprep.subr.mxu0 0.0
        %767 = vmatpush1.msra.mxu0 %v430
        %768 = vmatprep.mubr.f32.mxu0 %v395
        %769 = vmatmul.mubr.f32.gmra.mrb[0].mxu0 %v394
        %v770 = vpop.f32.mrb[0].mxu0
        %v771 = vadd.f32 %v703, %v770
        %v772 = vpop.f32.mrb[0].mxu0
        %773 = vdwg.mxu0
        %774 = vmatprep.subr.mxu0 0.0
        %775 = vmatpush1.msra.mxu0 %v431
        %776 = vmatprep.subr.mxu0 0.0
        %777 = vmatpush1.msra.mxu0 %v432
        %778 = vmatprep.subr.mxu0 0.0
        %779 = vmatpush1.msra.mxu0 %v433
        %780 = vmatprep.subr.mxu0 0.0
        %781 = vmatpush1.msra.mxu0 %v434
        %782 = vmatprep.subr.mxu0 0.0
        %783 = vmatpush1.msra.mxu0 %v435
        %784 = vmatprep.subr.mxu0 0.0
        %785 = vmatpush1.msra.mxu0 %v436
        %786 = vmatprep.subr.mxu0 0.0
        %787 = vmatpush1.msra.mxu0 %v437
        %788 = vmatprep.subr.mxu0 0.0
        %789 = vmatpush1.msra.mxu0 %v438
        %790 = vmatprep.subr.mxu0 0.0
        %791 = vmatpush1.msra.mxu0 %v439
        %792 = vmatprep.subr.mxu0 0.0
        %793 = vmatpush1.msra.mxu0 %v440
        %794 = vmatprep.subr.mxu0 0.0
        %795 = vmatpush1.msra.mxu0 %v441
        %796 = vmatprep.subr.mxu0 0.0
        %797 = vmatpush1.msra.mxu0 %v442
        %798 = vmatprep.subr.mxu0 0.0
        %799 = vmatpush1.msra.mxu0 %v443
        %800 = vmatprep.subr.mxu0 0.0
        %801 = vmatpush1.msra.mxu0 %v444
        %802 = vmatprep.subr.mxu0 0.0
        %803 = vmatpush1.msra.mxu0 %v445
        %804 = vmatprep.subr.mxu0 0.0
        %805 = vmatpush1.msra.mxu0 %v446
        %806 = vmatprep.subr.mxu0 0.0
        %807 = vmatpush1.msra.mxu0 %v447
        %808 = vmatprep.subr.mxu0 0.0
        %809 = vmatpush1.msra.mxu0 %v448
        %810 = vmatprep.subr.mxu0 0.0
        %811 = vmatpush1.msra.mxu0 %v449
        %812 = vmatprep.subr.mxu0 0.0
        %813 = vmatpush1.msra.mxu0 %v450
        %814 = vmatprep.subr.mxu0 0.0
        %815 = vmatpush1.msra.mxu0 %v451
        %816 = vmatprep.subr.mxu0 0.0
        %817 = vmatpush1.msra.mxu0 %v452
        %818 = vmatprep.subr.mxu0 0.0
        %819 = vmatpush1.msra.mxu0 %v453
        %820 = vmatprep.subr.mxu0 0.0
        %821 = vmatpush1.msra.mxu0 %v454
        %822 = vmatprep.subr.mxu0 0.0
        %823 = vmatpush1.msra.mxu0 %v455
        %824 = vmatprep.subr.mxu0 0.0
        %825 = vmatpush1.msra.mxu0 %v456
        %826 = vmatprep.subr.mxu0 0.0
        %827 = vmatpush1.msra.mxu0 %v457
        %828 = vmatprep.subr.mxu0 0.0
        %829 = vmatpush1.msra.mxu0 %v458
        %830 = vmatprep.subr.mxu0 0.0
        %831 = vmatpush1.msra.mxu0 %v459
        %832 = vmatprep.subr.mxu0 0.0
        %833 = vmatpush1.msra.mxu0 %v460
        %834 = vmatprep.subr.mxu0 0.0
        %835 = vmatpush1.msra.mxu0 %v461
        %836 = vmatprep.subr.mxu0 0.0
        %837 = vmatpush1.msra.mxu0 %v462
        %838 = vmatprep.mubr.f32.mxu0 %v397
        %839 = vmatmul.mubr.f32.gmra.mrb[0].mxu0 %v396
        %v840 = vpop.f32.mrb[0].mxu0
        %v841 = vadd.f32 %v771, %v840
        %v842 = vpop.f32.mrb[0].mxu0
        %843 = vdwg.mxu0
        %v845 = vlaneseq
        %v846 = vshrl.u32 %v845, 7
        %v847 = vsub.s32 0, %v846
        %v848 = vrot.slane %v696, %v847
        %v850 = vadd.f32 %v841, %v848
        %851 = vst [vmem:[%s384] sm:$0xff] %v850
        %s852 = sand.u32 %s224, 1
        %s853 = scalar_lea.sflag [#allocation4], %s852
        %s854 = sand.u32 %s224, 1
        %s855 = smul.addr %s854, 8
        %s856 = scalar_lea.vmem [#allocation8], %s855
        // Predicated region
        $region61: #{tpu_custom_call.1} parent=47 // pred_check
          %p857 = pneg %p234
        $region62: #{tpu_custom_call.1} parent=47 // pred_check_branch
          %859 = sbr.rel (%p857) target = $region64
        $region63: #{tpu_custom_call.1} parent=47 // pred_region
          %s861 = ssub.s32 128, 128
          %862 = vsyncadd %s853, %s861
          %s863 = sadd.s32 %s29, %s30
          %s864 = smul.addr %s863, 128
          %s865 = scalar_lea.hbm %s7, %s864
          %s867 = sshll.u32 %s856, 4
          %s868 = int_to_ptr.vmem [resolvable:$true] %s867
          %870 = dma.vmem_to_hbm [thread:$0]  %s868, 128, %s865, %s853
        $region64: #{tpu_custom_call.1} parent=47 // pred_fallthru
          _
      $region48: #{tpu_custom_call.1} parent=5 // pred_fallthru
        _
      %p871 = scmp.le.s32.totalorder 2, %s20
      // Predicated region
      $region65: #{tpu_custom_call.1} parent=5 // pred_check
        %p872 = pneg %p871
      $region66: #{tpu_custom_call.1} parent=5 // pred_check_branch
        %874 = sbr.rel (%p872) target = $region68
      $region67: #{tpu_custom_call.1} parent=5 // pred_region
        %s875 = ssub.s32 %s20, 2
        // Predicated region
        $region69: #{tpu_custom_call.1} parent=67 // pred_check
          %p876 = pneg %p240
        $region70: #{tpu_custom_call.1} parent=67 // pred_check_branch
          %878 = sbr.rel (%p876) target = $region72
        $region71: #{tpu_custom_call.1} parent=67 // pred_region
          %s879 = sand.u32 %s225, 1
          %s880 = scalar_lea.sflag [#allocation4], %s879
          %s881 = sand.u32 %s225, 1
          %s882 = smul.addr %s881, 8
          %s883 = scalar_lea.vmem [#allocation8], %s882
          %884 = dma.done %s880, 128
        $region72: #{tpu_custom_call.1} parent=67 // pred_fallthru
          _
      $region68: #{tpu_custom_call.1} parent=5 // pred_fallthru
        _
    $region6: #{tpu_custom_call.1} parent=1 // loop_footer
      %s24 = sadd.s32 1, %s20
    $region7: #{tpu_custom_call.1} parent=1 // loop_footer_branch
      %19 = sbr.rel target = $region3
    $region8: #{tpu_custom_call.1} parent=1 // loop_exit
      _
    %885 = vsyncpa [#allocation3], 1
    %s886 = scalar_lea.sflag [#allocation3], 1
    %887 = vsyncpa %s886, 1
    %888 = vsyncpa [#allocation6], 1
    %889 = vsyncpa [#allocation4], 1
    %s890 = scalar_lea.sflag [#allocation4], 1
    %891 = vsyncpa %s890, 1

</llo_original>
